<compile_context>
chip_gen: v6e
topology: v6e:2x2x1
jax: 0.10.0
libtpu: 0.0.40
codegen_flags: <defaults>
</compile_context>

<pallas_src>
import numpy as np

import jax
import jax.numpy as jnp
from jax.experimental import pallas as pl
from jax.experimental.pallas import tpu as pltpu


# (Cout, Cin, k, stride, activation applied after the conv) — mirrors nn.Sequential.
LAYER_CFG = [
    (8, 1, 3, 1, "none"),
    (8, 8, 3, 2, "leaky"),
    (16, 8, 3, 1, "none"),
    (16, 16, 3, 2, "leaky"),
    (1, 16, 4, 1, "sigmoid"),
]
IN_H = IN_W = 28  # only spatial size that reaches a 1x1 output through this stack


# ----------------------------------------------------------------------------
# Host-side (one-time) weight unrolling: conv -> block-Toeplitz matrix.
# ----------------------------------------------------------------------------
def build_conv_matrix(w, in_w, stride):
    """Unroll a PyTorch-layout conv weight (Cout, Cin, k, k) into WB of shape
    (k*in_w*Cin, Wo*Cout) such that, with activations stored as rows of width
    in_w*Cin with layout [col*Cin + chan], a whole output row is one matmul:

        out_row[wo*Cout + co] = patch_row @ WB
        patch_row[i*in_w*Cin + j'*Cin + c] = A[stride*ho + i, j', c]
    """
    w = np.asarray(w, np.float32)
    cout, cin, k, _ = w.shape
    wo_dim = (in_w - k) // stride + 1
    wb = np.zeros((k * in_w * cin, wo_dim * cout), np.float32)
    for i in range(k):
        for j in range(k):
            blk = w[:, :, i, j].T                       # (Cin, Cout)
            for wo in range(wo_dim):
                jp = stride * wo + j                    # input column for output col wo
                r0 = i * in_w * cin + jp * cin
                wb[r0:r0 + cin, wo * cout:(wo + 1) * cout] = blk
    return jnp.asarray(wb)


# ----------------------------------------------------------------------------
# The fused Pallas kernel: whole discriminator for one sample.
# ----------------------------------------------------------------------------
def _dnet_kernel(x_ref, w1, w2, w3, w4, w5, b1, b2, b3, b4, b5, o_ref):
    def conv(prev, k, s, w_ref, b_ref, act):
        # prev: (H, W*Cin) value; returns (Ho, Wo*Cout) value.
        h_in = prev.shape[0]
        ho = (h_in - k) // s + 1
        rspan = s * (ho - 1) + 1
        # Row-wise im2col: lane-block i of row r holds input row (r + i).
        cat = jnp.concatenate([prev[i:i + rspan, :] for i in range(k)], axis=1)
        if s > 1:
            # Keep rows 0, s, 2s, ... via a tiny 0/1 selection matmul
            # (avoids strided sublane loads entirely).
            r = jax.lax.broadcasted_iota(jnp.int32, (ho, rspan), 0)
            c = jax.lax.broadcasted_iota(jnp.int32, (ho, rspan), 1)
            sel = jnp.where(c == s * r, 1.0, 0.0)
            cat = jnp.dot(sel, cat, preferred_element_type=jnp.float32)
        y = jnp.dot(cat, w_ref[...], preferred_element_type=jnp.float32)
        y = y + b_ref[...]                               # (Ho, Wo*Cout) + (1, Wo*Cout)
        if act == "leaky":
            y = jnp.where(y >= 0.0, y, 0.2 * y)
        elif act == "sigmoid":
            y = 1.0 / (1.0 + jnp.exp(-y))
        return y

    a0 = x_ref[...]                          # (28, 28)   [H, W*Cin], Cin = 1
    a1 = conv(a0, 3, 1, w1, b1, "none")      # (26, 208)
    a2 = conv(a1, 3, 2, w2, b2, "leaky")     # (12,  96)
    a3 = conv(a2, 3, 1, w3, b3, "none")      # (10, 160)
    a4 = conv(a3, 3, 2, w4, b4, "leaky")     # ( 4,  64)
    a5 = conv(a4, 4, 1, w5, b5, "sigmoid")   # ( 1,   1)
    o_ref[...] = a5


def dnetwork_forward(x_nchw, params):
    """x_nchw: (N, 1, 28, 28) f32 -> (N,) f32, matching DNetwork.forward."""
    n = x_nchw.shape[0]
    x2d = x_nchw.reshape(n, IN_H, IN_W)      # Cin == 1, so (H, W*Cin) == (28, 28)
    ws = [p["w_mat"] for p in params]
    bs = [p["b_row"] for p in params]
    out = pl.pallas_call(
        _dnet_kernel,
        out_shape=jax.ShapeDtypeStruct((n, 1, 1), jnp.float32),
        grid=(n,),
        in_specs=(
            [pl.BlockSpec((None, IN_H, IN_W), lambda i: (i, 0, 0))]
            + [pl.BlockSpec(w.shape, lambda i: (0, 0)) for w in ws]
            + [pl.BlockSpec(b.shape, lambda i: (0, 0)) for b in bs]
        ),
        out_specs=pl.BlockSpec((None, 1, 1), lambda i: (i, 0, 0)),
        compiler_params=pltpu.CompilerParams(dimension_semantics=("parallel",)),
    )(x2d, *ws, *bs)
    return out.reshape(-1, 1).squeeze()


# ----------------------------------------------------------------------------
# Deterministic parameter construction (PyTorch-style init, kept in f32).
# ----------------------------------------------------------------------------
def make_params(key):
    params = []
    h, w_sp = IN_H, IN_W
    for (cout, cin, k, s, act) in LAYER_CFG:
        key, kw, kb = jax.random.split(key, 3)
        scale = 1.0 / float(np.sqrt(cin * k * k))
        wt = jax.random.uniform(kw, (cout, cin, k, k), jnp.float32, -scale, scale)
        bias = jax.random.uniform(kb, (cout,), jnp.float32, -scale, scale)
        ho = (h - k) // s + 1
        wo = (w_sp - k) // s + 1
        params.append(dict(
            w_torch=wt, b_torch=bias, s=s, act=act,
            w_mat=build_conv_matrix(wt, w_sp, s),             # (k*w_sp*cin, wo*cout)
            b_row=jnp.tile(bias, wo).reshape(1, wo * cout),   # (1, wo*cout)
        ))
        h, w_sp = ho, wo
    return params


# ----------------------------------------------------------------------------
# Independent plain-JAX reference (lax.conv at HIGHEST precision).
# ----------------------------------------------------------------------------
def dnetwork_forward_ref(x_nchw, params):
    h = x_nchw
    for p in params:
        h = jax.lax.conv_general_dilated(
            h, p["w_torch"], window_strides=(p["s"], p["s"]), padding="VALID",
            dimension_numbers=("NCHW", "OIHW", "NCHW"),
            precision=jax.lax.Precision.HIGHEST)
        h = h + p["b_torch"].reshape(1, -1, 1, 1)
        if p["act"] == "leaky":
            h = jnp.where(h >= 0.0, h, 0.2 * h)
        elif p["act"] == "sigmoid":
            h = 1.0 / (1.0 + jnp.exp(-h))
    return h.reshape(-1, 1).squeeze()


if __name__ == "__main__":
    key = jax.random.PRNGKey(0)
    key, kx = jax.random.split(key)

    N = 2
    x = jax.random.normal(kx, (N, 1, IN_H, IN_W), jnp.float32)
    params = make_params(key)

    out = jax.block_until_ready(dnetwork_forward(x, params))
    ref = dnetwork_forward_ref(x, params)

    assert out.shape == (N,), out.shape
    # Tolerance allows for the different (but mathematically equivalent) summation
    # structure and for possible bf16-pass decomposition of f32 MXU matmuls; real
    # indexing/layout bugs would produce errors orders of magnitude larger.
    assert jnp.allclose(out, ref, atol=2e-3, rtol=2e-3), (out, ref)
    print("KERNEL_OK")
</pallas_src>

<mosaic_0001>
module attributes {stable_mosaic.version = 11 : i64} {
  func.func @_dnet_kernel(%arg0: i32, %arg1: memref<1x28x28xf32, #tpu.memory_space<vmem>>, %arg2: memref<84x208xf32, #tpu.memory_space<vmem>>, %arg3: memref<624x96xf32, #tpu.memory_space<vmem>>, %arg4: memref<288x160xf32, #tpu.memory_space<vmem>>, %arg5: memref<480x64xf32, #tpu.memory_space<vmem>>, %arg6: memref<256x1xf32, #tpu.memory_space<vmem>>, %arg7: memref<1x208xf32, #tpu.memory_space<vmem>>, %arg8: memref<1x96xf32, #tpu.memory_space<vmem>>, %arg9: memref<1x160xf32, #tpu.memory_space<vmem>>, %arg10: memref<1x64xf32, #tpu.memory_space<vmem>>, %arg11: memref<1x1xf32, #tpu.memory_space<vmem>>, %arg12: memref<1x1x1xf32, #tpu.memory_space<vmem>>) attributes {dimension_semantics = [#tpu.dimension_semantics<parallel>], iteration_bounds = array<i64: 2>, scalar_prefetch = 0 : i64, scratch_operands = 0 : i64, tpu.core_type = #tpu.core_type<tc>, window_params = [{transform_indices = @transform_0, window_bounds = array<i64: 1, 28, 28>}, {pipeline_mode = #tpu.pipeline_mode<synchronous>, transform_indices = @transform_1, window_bounds = array<i64: 84, 208>}, {pipeline_mode = #tpu.pipeline_mode<synchronous>, transform_indices = @transform_2, window_bounds = array<i64: 624, 96>}, {pipeline_mode = #tpu.pipeline_mode<synchronous>, transform_indices = @transform_3, window_bounds = array<i64: 288, 160>}, {pipeline_mode = #tpu.pipeline_mode<synchronous>, transform_indices = @transform_4, window_bounds = array<i64: 480, 64>}, {pipeline_mode = #tpu.pipeline_mode<synchronous>, transform_indices = @transform_5, window_bounds = array<i64: 256, 1>}, {pipeline_mode = #tpu.pipeline_mode<synchronous>, transform_indices = @transform_6, window_bounds = array<i64: 1, 208>}, {pipeline_mode = #tpu.pipeline_mode<synchronous>, transform_indices = @transform_7, window_bounds = array<i64: 1, 96>}, {pipeline_mode = #tpu.pipeline_mode<synchronous>, transform_indices = @transform_8, window_bounds = array<i64: 1, 160>}, {pipeline_mode = #tpu.pipeline_mode<synchronous>, transform_indices = @transform_9, window_bounds = array<i64: 1, 64>}, {pipeline_mode = #tpu.pipeline_mode<synchronous>, transform_indices = @transform_10, window_bounds = array<i64: 1, 1>}, {transform_indices = @transform_11, window_bounds = array<i64: 1, 1, 1>}]} {
    %c0 = arith.constant 0 : index
    %c0_0 = arith.constant 0 : index
    %c0_1 = arith.constant 0 : index
    %0 = vector.load %arg1[%c0, %c0_0, %c0_1] : memref<1x28x28xf32, #tpu.memory_space<vmem>>, vector<1x28x28xf32>
    %1 = vector.shape_cast %0 : vector<1x28x28xf32> to vector<28x28xf32>
    %2 = vector.extract_strided_slice %1 {offsets = [0, 0], sizes = [26, 28], strides = [1, 1]} : vector<28x28xf32> to vector<26x28xf32>
    %3 = vector.extract_strided_slice %1 {offsets = [1, 0], sizes = [26, 28], strides = [1, 1]} : vector<28x28xf32> to vector<26x28xf32>
    %4 = vector.extract_strided_slice %1 {offsets = [2, 0], sizes = [26, 28], strides = [1, 1]} : vector<28x28xf32> to vector<26x28xf32>
    %5 = tpu.concatenate %2, %3, %4 in 1 : vector<26x28xf32>, vector<26x28xf32>, vector<26x28xf32> -> vector<26x84xf32>
    %c0_2 = arith.constant 0 : index
    %c0_3 = arith.constant 0 : index
    %6 = vector.load %arg2[%c0_2, %c0_3] : memref<84x208xf32, #tpu.memory_space<vmem>>, vector<84x208xf32>
    %cst = arith.constant dense<0.000000e+00> : vector<26x208xf32>
    %7 = tpu.matmul %5, %6, %cst {dimension_numbers = #tpu.dot_dimension_numbers<[1], [0], [0], [1], [0, 0, 1, 1], [], []>} : vector<26x84xf32>, vector<84x208xf32>, vector<26x208xf32> -> vector<26x208xf32>
    %c0_4 = arith.constant 0 : index
    %c0_5 = arith.constant 0 : index
    %8 = vector.load %arg7[%c0_4, %c0_5] : memref<1x208xf32, #tpu.memory_space<vmem>>, vector<1x208xf32>
    %9 = vector.broadcast %8 : vector<1x208xf32> to vector<26x208xf32>
    %10 = arith.addf %7, %9 : vector<26x208xf32>
    %11 = vector.extract_strided_slice %10 {offsets = [0, 0], sizes = [23, 208], strides = [1, 1]} : vector<26x208xf32> to vector<23x208xf32>
    %12 = vector.extract_strided_slice %10 {offsets = [1, 0], sizes = [23, 208], strides = [1, 1]} : vector<26x208xf32> to vector<23x208xf32>
    %13 = vector.extract_strided_slice %10 {offsets = [2, 0], sizes = [23, 208], strides = [1, 1]} : vector<26x208xf32> to vector<23x208xf32>
    %14 = tpu.concatenate %11, %12, %13 in 1 : vector<23x208xf32>, vector<23x208xf32>, vector<23x208xf32> -> vector<23x624xf32>
    %15 = tpu.iota {dimensions = array<i32: 0>} : vector<12x23xi32>
    %16 = tpu.iota {dimensions = array<i32: 1>} : vector<12x23xi32>
    %c2_i32 = arith.constant 2 : i32
    %17 = vector.broadcast %c2_i32 : i32 to vector<12x23xi32>
    %18 = arith.muli %17, %15 : vector<12x23xi32>
    %19 = arith.cmpi eq, %16, %18 : vector<12x23xi32>
    %cst_6 = arith.constant 1.000000e+00 : f32
    %cst_7 = arith.constant 0.000000e+00 : f32
    %20 = vector.broadcast %cst_6 : f32 to vector<12x23xf32>
    %21 = vector.broadcast %cst_7 : f32 to vector<12x23xf32>
    %22 = arith.select %19, %20, %21 : vector<12x23xi1>, vector<12x23xf32>
    %cst_8 = arith.constant dense<0.000000e+00> : vector<12x624xf32>
    %23 = tpu.matmul %22, %14, %cst_8 {dimension_numbers = #tpu.dot_dimension_numbers<[1], [0], [0], [1], [0, 0, 1, 1], [], []>} : vector<12x23xf32>, vector<23x624xf32>, vector<12x624xf32> -> vector<12x624xf32>
    %c0_9 = arith.constant 0 : index
    %c0_10 = arith.constant 0 : index
    %24 = vector.load %arg3[%c0_9, %c0_10] : memref<624x96xf32, #tpu.memory_space<vmem>>, vector<624x96xf32>
    %cst_11 = arith.constant dense<0.000000e+00> : vector<12x96xf32>
    %25 = tpu.matmul %23, %24, %cst_11 {dimension_numbers = #tpu.dot_dimension_numbers<[1], [0], [0], [1], [0, 0, 1, 1], [], []>} : vector<12x624xf32>, vector<624x96xf32>, vector<12x96xf32> -> vector<12x96xf32>
    %c0_12 = arith.constant 0 : index
    %c0_13 = arith.constant 0 : index
    %26 = vector.load %arg8[%c0_12, %c0_13] : memref<1x96xf32, #tpu.memory_space<vmem>>, vector<1x96xf32>
    %27 = vector.broadcast %26 : vector<1x96xf32> to vector<12x96xf32>
    %28 = arith.addf %25, %27 : vector<12x96xf32>
    %cst_14 = arith.constant 0.000000e+00 : f32
    %29 = vector.broadcast %cst_14 : f32 to vector<12x96xf32>
    %30 = arith.cmpf oge, %28, %29 : vector<12x96xf32>
    %cst_15 = arith.constant 2.000000e-01 : f32
    %31 = vector.broadcast %cst_15 : f32 to vector<12x96xf32>
    %32 = arith.mulf %31, %28 : vector<12x96xf32>
    %33 = arith.select %30, %28, %32 : vector<12x96xi1>, vector<12x96xf32>
    %34 = vector.extract_strided_slice %33 {offsets = [0, 0], sizes = [10, 96], strides = [1, 1]} : vector<12x96xf32> to vector<10x96xf32>
    %35 = vector.extract_strided_slice %33 {offsets = [1, 0], sizes = [10, 96], strides = [1, 1]} : vector<12x96xf32> to vector<10x96xf32>
    %36 = vector.extract_strided_slice %33 {offsets = [2, 0], sizes = [10, 96], strides = [1, 1]} : vector<12x96xf32> to vector<10x96xf32>
    %37 = tpu.concatenate %34, %35, %36 in 1 : vector<10x96xf32>, vector<10x96xf32>, vector<10x96xf32> -> vector<10x288xf32>
    %c0_16 = arith.constant 0 : index
    %c0_17 = arith.constant 0 : index
    %38 = vector.load %arg4[%c0_16, %c0_17] : memref<288x160xf32, #tpu.memory_space<vmem>>, vector<288x160xf32>
    %cst_18 = arith.constant dense<0.000000e+00> : vector<10x160xf32>
    %39 = tpu.matmul %37, %38, %cst_18 {dimension_numbers = #tpu.dot_dimension_numbers<[1], [0], [0], [1], [0, 0, 1, 1], [], []>} : vector<10x288xf32>, vector<288x160xf32>, vector<10x160xf32> -> vector<10x160xf32>
    %c0_19 = arith.constant 0 : index
    %c0_20 = arith.constant 0 : index
    %40 = vector.load %arg9[%c0_19, %c0_20] : memref<1x160xf32, #tpu.memory_space<vmem>>, vector<1x160xf32>
    %41 = vector.broadcast %40 : vector<1x160xf32> to vector<10x160xf32>
    %42 = arith.addf %39, %41 : vector<10x160xf32>
    %43 = vector.extract_strided_slice %42 {offsets = [0, 0], sizes = [7, 160], strides = [1, 1]} : vector<10x160xf32> to vector<7x160xf32>
    %44 = vector.extract_strided_slice %42 {offsets = [1, 0], sizes = [7, 160], strides = [1, 1]} : vector<10x160xf32> to vector<7x160xf32>
    %45 = vector.extract_strided_slice %42 {offsets = [2, 0], sizes = [7, 160], strides = [1, 1]} : vector<10x160xf32> to vector<7x160xf32>
    %46 = tpu.concatenate %43, %44, %45 in 1 : vector<7x160xf32>, vector<7x160xf32>, vector<7x160xf32> -> vector<7x480xf32>
    %47 = tpu.iota {dimensions = array<i32: 0>} : vector<4x7xi32>
    %48 = tpu.iota {dimensions = array<i32: 1>} : vector<4x7xi32>
    %c2_i32_21 = arith.constant 2 : i32
    %49 = vector.broadcast %c2_i32_21 : i32 to vector<4x7xi32>
    %50 = arith.muli %49, %47 : vector<4x7xi32>
    %51 = arith.cmpi eq, %48, %50 : vector<4x7xi32>
    %cst_22 = arith.constant 1.000000e+00 : f32
    %cst_23 = arith.constant 0.000000e+00 : f32
    %52 = vector.broadcast %cst_22 : f32 to vector<4x7xf32>
    %53 = vector.broadcast %cst_23 : f32 to vector<4x7xf32>
    %54 = arith.select %51, %52, %53 : vector<4x7xi1>, vector<4x7xf32>
    %cst_24 = arith.constant dense<0.000000e+00> : vector<4x480xf32>
    %55 = tpu.matmul %54, %46, %cst_24 {dimension_numbers = #tpu.dot_dimension_numbers<[1], [0], [0], [1], [0, 0, 1, 1], [], []>} : vector<4x7xf32>, vector<7x480xf32>, vector<4x480xf32> -> vector<4x480xf32>
    %c0_25 = arith.constant 0 : index
    %c0_26 = arith.constant 0 : index
    %56 = vector.load %arg5[%c0_25, %c0_26] : memref<480x64xf32, #tpu.memory_space<vmem>>, vector<480x64xf32>
    %cst_27 = arith.constant dense<0.000000e+00> : vector<4x64xf32>
    %57 = tpu.matmul %55, %56, %cst_27 {dimension_numbers = #tpu.dot_dimension_numbers<[1], [0], [0], [1], [0, 0, 1, 1], [], []>} : vector<4x480xf32>, vector<480x64xf32>, vector<4x64xf32> -> vector<4x64xf32>
    %c0_28 = arith.constant 0 : index
    %c0_29 = arith.constant 0 : index
    %58 = vector.load %arg10[%c0_28, %c0_29] : memref<1x64xf32, #tpu.memory_space<vmem>>, vector<1x64xf32>
    %59 = vector.broadcast %58 : vector<1x64xf32> to vector<4x64xf32>
    %60 = arith.addf %57, %59 : vector<4x64xf32>
    %cst_30 = arith.constant 0.000000e+00 : f32
    %61 = vector.broadcast %cst_30 : f32 to vector<4x64xf32>
    %62 = arith.cmpf oge, %60, %61 : vector<4x64xf32>
    %cst_31 = arith.constant 2.000000e-01 : f32
    %63 = vector.broadcast %cst_31 : f32 to vector<4x64xf32>
    %64 = arith.mulf %63, %60 : vector<4x64xf32>
    %65 = arith.select %62, %60, %64 : vector<4x64xi1>, vector<4x64xf32>
    %66 = vector.extract_strided_slice %65 {offsets = [0, 0], sizes = [1, 64], strides = [1, 1]} : vector<4x64xf32> to vector<1x64xf32>
    %67 = vector.extract_strided_slice %65 {offsets = [1, 0], sizes = [1, 64], strides = [1, 1]} : vector<4x64xf32> to vector<1x64xf32>
    %68 = vector.extract_strided_slice %65 {offsets = [2, 0], sizes = [1, 64], strides = [1, 1]} : vector<4x64xf32> to vector<1x64xf32>
    %69 = vector.extract_strided_slice %65 {offsets = [3, 0], sizes = [1, 64], strides = [1, 1]} : vector<4x64xf32> to vector<1x64xf32>
    %70 = tpu.concatenate %66, %67, %68, %69 in 1 : vector<1x64xf32>, vector<1x64xf32>, vector<1x64xf32>, vector<1x64xf32> -> vector<1x256xf32>
    %c0_32 = arith.constant 0 : index
    %c0_33 = arith.constant 0 : index
    %71 = vector.load %arg6[%c0_32, %c0_33] : memref<256x1xf32, #tpu.memory_space<vmem>>, vector<256x1xf32>
    %cst_34 = arith.constant dense<0.000000e+00> : vector<1x1xf32>
    %72 = tpu.matmul %70, %71, %cst_34 {dimension_numbers = #tpu.dot_dimension_numbers<[1], [0], [0], [1], [0, 0, 1, 1], [], []>} : vector<1x256xf32>, vector<256x1xf32>, vector<1x1xf32> -> vector<1x1xf32>
    %c0_35 = arith.constant 0 : index
    %c0_36 = arith.constant 0 : index
    %73 = vector.load %arg11[%c0_35, %c0_36] : memref<1x1xf32, #tpu.memory_space<vmem>>, vector<1x1xf32>
    %74 = arith.addf %72, %73 : vector<1x1xf32>
    %cst_37 = arith.constant 0.000000e+00 : f32
    %75 = vector.broadcast %cst_37 : f32 to vector<1x1xf32>
    %76 = arith.subf %75, %74 : vector<1x1xf32>
    %77 = math.exp %76 : vector<1x1xf32>
    %cst_38 = arith.constant 1.000000e+00 : f32
    %78 = vector.broadcast %cst_38 : f32 to vector<1x1xf32>
    %79 = arith.addf %78, %77 : vector<1x1xf32>
    %cst_39 = arith.constant 1.000000e+00 : f32
    %80 = vector.broadcast %cst_39 : f32 to vector<1x1xf32>
    %81 = arith.divf %80, %79 : vector<1x1xf32>
    %c0_40 = arith.constant 0 : index
    %c0_41 = arith.constant 0 : index
    %c0_42 = arith.constant 0 : index
    %82 = vector.load %arg12[%c0_40, %c0_41, %c0_42] : memref<1x1x1xf32, #tpu.memory_space<vmem>>, vector<1x1x1xf32>
    %83 = vector.shape_cast %82 : vector<1x1x1xf32> to vector<1x1xf32>
    %84 = vector.shape_cast %81 : vector<1x1xf32> to vector<1x1x1xf32>
    tpu.vector_store %arg12[%c0_40, %c0_41, %c0_42], %84 {strides = array<i32>} : memref<1x1x1xf32, #tpu.memory_space<vmem>>, vector<1x1x1xf32>,
    return
  }
  func.func @transform_0(%arg0: i32) -> (i32, i32, i32) {
    %c0_i32 = arith.constant 0 : i32
    %c0_i32_0 = arith.constant 0 : i32
    %c0_i32_1 = arith.constant 0 : i32
    return %arg0, %c0_i32, %c0_i32_0 : i32, i32, i32
  }
  func.func @transform_1(%arg0: i32) -> (i32, i32) {
    %c0_i32 = arith.constant 0 : i32
    %c0_i32_0 = arith.constant 0 : i32
    %c0_i32_1 = arith.constant 0 : i32
    return %c0_i32, %c0_i32_0 : i32, i32
  }
  func.func @transform_2(%arg0: i32) -> (i32, i32) {
    %c0_i32 = arith.constant 0 : i32
    %c0_i32_0 = arith.constant 0 : i32
    %c0_i32_1 = arith.constant 0 : i32
    return %c0_i32, %c0_i32_0 : i32, i32
  }
  func.func @transform_3(%arg0: i32) -> (i32, i32) {
    %c0_i32 = arith.constant 0 : i32
    %c0_i32_0 = arith.constant 0 : i32
    %c0_i32_1 = arith.constant 0 : i32
    return %c0_i32, %c0_i32_0 : i32, i32
  }
  func.func @transform_4(%arg0: i32) -> (i32, i32) {
    %c0_i32 = arith.constant 0 : i32
    %c0_i32_0 = arith.constant 0 : i32
    %c0_i32_1 = arith.constant 0 : i32
    return %c0_i32, %c0_i32_0 : i32, i32
  }
  func.func @transform_5(%arg0: i32) -> (i32, i32) {
    %c0_i32 = arith.constant 0 : i32
    %c0_i32_0 = arith.constant 0 : i32
    %c0_i32_1 = arith.constant 0 : i32
    return %c0_i32, %c0_i32_0 : i32, i32
  }
  func.func @transform_6(%arg0: i32) -> (i32, i32) {
    %c0_i32 = arith.constant 0 : i32
    %c0_i32_0 = arith.constant 0 : i32
    %c0_i32_1 = arith.constant 0 : i32
    return %c0_i32, %c0_i32_0 : i32, i32
  }
  func.func @transform_7(%arg0: i32) -> (i32, i32) {
    %c0_i32 = arith.constant 0 : i32
    %c0_i32_0 = arith.constant 0 : i32
    %c0_i32_1 = arith.constant 0 : i32
    return %c0_i32, %c0_i32_0 : i32, i32
  }
  func.func @transform_8(%arg0: i32) -> (i32, i32) {
    %c0_i32 = arith.constant 0 : i32
    %c0_i32_0 = arith.constant 0 : i32
    %c0_i32_1 = arith.constant 0 : i32
    return %c0_i32, %c0_i32_0 : i32, i32
  }
  func.func @transform_9(%arg0: i32) -> (i32, i32) {
    %c0_i32 = arith.constant 0 : i32
    %c0_i32_0 = arith.constant 0 : i32
    %c0_i32_1 = arith.constant 0 : i32
    return %c0_i32, %c0_i32_0 : i32, i32
  }
  func.func @transform_10(%arg0: i32) -> (i32, i32) {
    %c0_i32 = arith.constant 0 : i32
    %c0_i32_0 = arith.constant 0 : i32
    %c0_i32_1 = arith.constant 0 : i32
    return %c0_i32, %c0_i32_0 : i32, i32
  }
  func.func @transform_11(%arg0: i32) -> (i32, i32, i32) {
    %c0_i32 = arith.constant 0 : i32
    %c0_i32_0 = arith.constant 0 : i32
    %c0_i32_1 = arith.constant 0 : i32
    return %arg0, %c0_i32, %c0_i32_0 : i32, i32, i32
  }
}

</mosaic_0001>

<llo_original>
// kernel: tpu_custom_call.1
$region0: #{tpu_custom_call.1}
  #allocation0 [shape = 'u32[]', space=smem, size = 0x4, offset = 0x4, fixed_abs, tag = 'smem constant byte address 0x4 - core index']
  #allocation1 [shape = 'u32[144,128]{1,0:T(1,128)}', space=vmem, size = 0x12000, scoped, tag = 'internal scratch']
  #allocation2 [shape = 'f32[1,1]{1,0:T(1,128)S(1)}', space=vmem, size = 0x200, scoped, tag = 'scoped memory for tpu_custom_call.1']
  %s0 = inlined_call_operand.vmem [shape: f32[2,28,28], index: 0, kind: input, shape index: {}]
  %s1 = inlined_call_operand.vmem [shape: f32[84,208], index: 1, kind: input, shape index: {}]
  %s2 = inlined_call_operand.vmem [shape: f32[624,96], index: 2, kind: input, shape index: {}]
  %s3 = inlined_call_operand.vmem [shape: f32[288,160], index: 3, kind: input, shape index: {}]
  %s4 = inlined_call_operand.vmem [shape: f32[480,64], index: 4, kind: input, shape index: {}]
  %s5 = inlined_call_operand.vmem [shape: f32[256,1], index: 5, kind: input, shape index: {}]
  %s6 = inlined_call_operand.vmem [shape: f32[1,208], index: 6, kind: input, shape index: {}]
  %s7 = inlined_call_operand.vmem [shape: f32[1,96], index: 7, kind: input, shape index: {}]
  %s8 = inlined_call_operand.vmem [shape: f32[1,160], index: 8, kind: input, shape index: {}]
  %s9 = inlined_call_operand.vmem [shape: f32[1,64], index: 9, kind: input, shape index: {}]
  %s10 = inlined_call_operand.<no memory space> [shape: f32[1,1], index: 10, kind: input, shape index: {}]
  %s11 = inlined_call_operand.vmem [shape: f32[2,1,1], index: 11, kind: output, shape index: {}]
  %s12 = sld [smem:[#allocation0]]
  $region77: #{tpu_custom_call.1} parent=0
    _
  %s14 = ssub.s32 1, %s12
  %s15 = scalar_select 0, %s14, %s12
  %v16 = vstv %s10
  %17 = vst [vmem:[#allocation2] sm:$0x1] %v16
  loop: start=0, step=1, limit=4
  $region2: #{tpu_custom_call.1} parent=0 // loop_pre_header
    _
  $region3: #{tpu_custom_call.1} parent=0 // loop_header
    %s19 = sphi 0, %s23
    %p20 = scmp.ge.s32.totalorder %s19, 4
    %s29 = sphi 0, %s31
    %s32 = sphi 0, %s29
    %s33 = sphi 0, %s32
    %s49 = sphi 0, %s33
    %s53 = sphi 0, %s53
    %s55 = sphi 0, %s53
    %s56 = sphi 0, %s55
    %s70 = sphi 0, %s56
    %s74 = sphi 0, %s74
    %s76 = sphi 0, %s74
    %s77 = sphi 0, %s76
    %s91 = sphi 0, %s77
    %s95 = sphi 0, %s95
    %s97 = sphi 0, %s95
    %s98 = sphi 0, %s97
    %s112 = sphi 0, %s98
    %s116 = sphi 0, %s116
    %s118 = sphi 0, %s116
    %s119 = sphi 0, %s118
    %s133 = sphi 0, %s119
    %s137 = sphi 0, %s137
    %s139 = sphi 0, %s137
    %s140 = sphi 0, %s139
    %s154 = sphi 0, %s140
    %s158 = sphi 0, %s158
    %s160 = sphi 0, %s158
    %s161 = sphi 0, %s160
    %s175 = sphi 0, %s161
    %s179 = sphi 0, %s179
    %s181 = sphi 0, %s179
    %s182 = sphi 0, %s181
    %s196 = sphi 0, %s182
    %s200 = sphi 0, %s200
    %s202 = sphi 0, %s200
    %s203 = sphi 0, %s202
    %s217 = sphi 0, %s203
    %s221 = sphi 0, %s221
    %s223 = sphi 0, %s221
    %s224 = sphi 0, %s223
    %s238 = sphi 0, %s224
    %s242 = sphi 0, %s242
    %s244 = sphi 0, %s242
    %s245 = sphi 0, %s244
    %s259 = sphi 0, %s245
    %s265 = sphi 0, %s267
    %s268 = sphi 0, %s265
    %s269 = sphi 0, %s268
    %s285 = sphi 0, %s269
  $region4: #{tpu_custom_call.1} parent=0 // loop_header_branch
    %22 = sbr.rel (%p20) target = $region8
  $region5: #{tpu_custom_call.1} parent=0 // loop_body
    %s24 = ssub.s32 %s19, 1
    %s25 = ssub.s32 %s19, 2
    %s26 = sadd.s32 %s19, 1
    %s27 = ssub.s32 %s19, %s26
    %p28 = scmp.eq.s32.totalorder %s27, 0
    %s30 = sadd.s32 %s29, 1
    %s31 = scalar_select %p28, %s29, %s30
    %p34 = pneg %p28
    %p35 = scmp.eq.s32.totalorder %s19, 1
    %p36 = por %p34, %p35
    %p37 = scmp.ne.s32.totalorder %s29, %s32
    %p38 = scmp.eq.s32.totalorder %s19, 0
    %p39 = por %p37, %p38
    %p40 = scmp.ne.s32.totalorder %s29, %s32
    %p41 = scmp.eq.s32.totalorder %s24, 1
    %p42 = por %p40, %p41
    %p43 = scmp.ne.s32.totalorder %s32, %s33
    %p44 = scmp.eq.s32.totalorder %s24, 0
    %p45 = por %p43, %p44
    %p46 = scmp.ne.s32.totalorder %s32, %s33
    %p47 = scmp.eq.s32.totalorder %s25, 1
    %p48 = por %p46, %p47
    %p50 = scmp.ne.s32.totalorder %s33, %s49
    %p51 = scmp.eq.s32.totalorder %s25, 0
    %p52 = por %p50, %p51
    %s54 = sadd.s32 %s53, 1
    %p57 = scmp.eq.s32.totalorder %s19, 1
    %p58 = scmp.ne.s32.totalorder %s53, %s55
    %p59 = scmp.eq.s32.totalorder %s19, 0
    %p60 = por %p58, %p59
    %p61 = scmp.ne.s32.totalorder %s53, %s55
    %p62 = scmp.eq.s32.totalorder %s24, 1
    %p63 = por %p61, %p62
    %p64 = scmp.ne.s32.totalorder %s55, %s56
    %p65 = scmp.eq.s32.totalorder %s24, 0
    %p66 = por %p64, %p65
    %p67 = scmp.ne.s32.totalorder %s55, %s56
    %p68 = scmp.eq.s32.totalorder %s25, 1
    %p69 = por %p67, %p68
    %p71 = scmp.ne.s32.totalorder %s56, %s70
    %p72 = scmp.eq.s32.totalorder %s25, 0
    %p73 = por %p71, %p72
    %s75 = sadd.s32 %s74, 1
    %p78 = scmp.eq.s32.totalorder %s19, 1
    %p79 = scmp.ne.s32.totalorder %s74, %s76
    %p80 = scmp.eq.s32.totalorder %s19, 0
    %p81 = por %p79, %p80
    %p82 = scmp.ne.s32.totalorder %s74, %s76
    %p83 = scmp.eq.s32.totalorder %s24, 1
    %p84 = por %p82, %p83
    %p85 = scmp.ne.s32.totalorder %s76, %s77
    %p86 = scmp.eq.s32.totalorder %s24, 0
    %p87 = por %p85, %p86
    %p88 = scmp.ne.s32.totalorder %s76, %s77
    %p89 = scmp.eq.s32.totalorder %s25, 1
    %p90 = por %p88, %p89
    %p92 = scmp.ne.s32.totalorder %s77, %s91
    %p93 = scmp.eq.s32.totalorder %s25, 0
    %p94 = por %p92, %p93
    %s96 = sadd.s32 %s95, 1
    %p99 = scmp.eq.s32.totalorder %s19, 1
    %p100 = scmp.ne.s32.totalorder %s95, %s97
    %p101 = scmp.eq.s32.totalorder %s19, 0
    %p102 = por %p100, %p101
    %p103 = scmp.ne.s32.totalorder %s95, %s97
    %p104 = scmp.eq.s32.totalorder %s24, 1
    %p105 = por %p103, %p104
    %p106 = scmp.ne.s32.totalorder %s97, %s98
    %p107 = scmp.eq.s32.totalorder %s24, 0
    %p108 = por %p106, %p107
    %p109 = scmp.ne.s32.totalorder %s97, %s98
    %p110 = scmp.eq.s32.totalorder %s25, 1
    %p111 = por %p109, %p110
    %p113 = scmp.ne.s32.totalorder %s98, %s112
    %p114 = scmp.eq.s32.totalorder %s25, 0
    %p115 = por %p113, %p114
    %s117 = sadd.s32 %s116, 1
    %p120 = scmp.eq.s32.totalorder %s19, 1
    %p121 = scmp.ne.s32.totalorder %s116, %s118
    %p122 = scmp.eq.s32.totalorder %s19, 0
    %p123 = por %p121, %p122
    %p124 = scmp.ne.s32.totalorder %s116, %s118
    %p125 = scmp.eq.s32.totalorder %s24, 1
    %p126 = por %p124, %p125
    %p127 = scmp.ne.s32.totalorder %s118, %s119
    %p128 = scmp.eq.s32.totalorder %s24, 0
    %p129 = por %p127, %p128
    %p130 = scmp.ne.s32.totalorder %s118, %s119
    %p131 = scmp.eq.s32.totalorder %s25, 1
    %p132 = por %p130, %p131
    %p134 = scmp.ne.s32.totalorder %s119, %s133
    %p135 = scmp.eq.s32.totalorder %s25, 0
    %p136 = por %p134, %p135
    %s138 = sadd.s32 %s137, 1
    %p141 = scmp.eq.s32.totalorder %s19, 1
    %p142 = scmp.ne.s32.totalorder %s137, %s139
    %p143 = scmp.eq.s32.totalorder %s19, 0
    %p144 = por %p142, %p143
    %p145 = scmp.ne.s32.totalorder %s137, %s139
    %p146 = scmp.eq.s32.totalorder %s24, 1
    %p147 = por %p145, %p146
    %p148 = scmp.ne.s32.totalorder %s139, %s140
    %p149 = scmp.eq.s32.totalorder %s24, 0
    %p150 = por %p148, %p149
    %p151 = scmp.ne.s32.totalorder %s139, %s140
    %p152 = scmp.eq.s32.totalorder %s25, 1
    %p153 = por %p151, %p152
    %p155 = scmp.ne.s32.totalorder %s140, %s154
    %p156 = scmp.eq.s32.totalorder %s25, 0
    %p157 = por %p155, %p156
    %s159 = sadd.s32 %s158, 1
    %p162 = scmp.eq.s32.totalorder %s19, 1
    %p163 = scmp.ne.s32.totalorder %s158, %s160
    %p164 = scmp.eq.s32.totalorder %s19, 0
    %p165 = por %p163, %p164
    %p166 = scmp.ne.s32.totalorder %s158, %s160
    %p167 = scmp.eq.s32.totalorder %s24, 1
    %p168 = por %p166, %p167
    %p169 = scmp.ne.s32.totalorder %s160, %s161
    %p170 = scmp.eq.s32.totalorder %s24, 0
    %p171 = por %p169, %p170
    %p172 = scmp.ne.s32.totalorder %s160, %s161
    %p173 = scmp.eq.s32.totalorder %s25, 1
    %p174 = por %p172, %p173
    %p176 = scmp.ne.s32.totalorder %s161, %s175
    %p177 = scmp.eq.s32.totalorder %s25, 0
    %p178 = por %p176, %p177
    %s180 = sadd.s32 %s179, 1
    %p183 = scmp.eq.s32.totalorder %s19, 1
    %p184 = scmp.ne.s32.totalorder %s179, %s181
    %p185 = scmp.eq.s32.totalorder %s19, 0
    %p186 = por %p184, %p185
    %p187 = scmp.ne.s32.totalorder %s179, %s181
    %p188 = scmp.eq.s32.totalorder %s24, 1
    %p189 = por %p187, %p188
    %p190 = scmp.ne.s32.totalorder %s181, %s182
    %p191 = scmp.eq.s32.totalorder %s24, 0
    %p192 = por %p190, %p191
    %p193 = scmp.ne.s32.totalorder %s181, %s182
    %p194 = scmp.eq.s32.totalorder %s25, 1
    %p195 = por %p193, %p194
    %p197 = scmp.ne.s32.totalorder %s182, %s196
    %p198 = scmp.eq.s32.totalorder %s25, 0
    %p199 = por %p197, %p198
    %s201 = sadd.s32 %s200, 1
    %p204 = scmp.eq.s32.totalorder %s19, 1
    %p205 = scmp.ne.s32.totalorder %s200, %s202
    %p206 = scmp.eq.s32.totalorder %s19, 0
    %p207 = por %p205, %p206
    %p208 = scmp.ne.s32.totalorder %s200, %s202
    %p209 = scmp.eq.s32.totalorder %s24, 1
    %p210 = por %p208, %p209
    %p211 = scmp.ne.s32.totalorder %s202, %s203
    %p212 = scmp.eq.s32.totalorder %s24, 0
    %p213 = por %p211, %p212
    %p214 = scmp.ne.s32.totalorder %s202, %s203
    %p215 = scmp.eq.s32.totalorder %s25, 1
    %p216 = por %p214, %p215
    %p218 = scmp.ne.s32.totalorder %s203, %s217
    %p219 = scmp.eq.s32.totalorder %s25, 0
    %p220 = por %p218, %p219
    %s222 = sadd.s32 %s221, 1
    %p225 = scmp.eq.s32.totalorder %s19, 1
    %p226 = scmp.ne.s32.totalorder %s221, %s223
    %p227 = scmp.eq.s32.totalorder %s19, 0
    %p228 = por %p226, %p227
    %p229 = scmp.ne.s32.totalorder %s221, %s223
    %p230 = scmp.eq.s32.totalorder %s24, 1
    %p231 = por %p229, %p230
    %p232 = scmp.ne.s32.totalorder %s223, %s224
    %p233 = scmp.eq.s32.totalorder %s24, 0
    %p234 = por %p232, %p233
    %p235 = scmp.ne.s32.totalorder %s223, %s224
    %p236 = scmp.eq.s32.totalorder %s25, 1
    %p237 = por %p235, %p236
    %p239 = scmp.ne.s32.totalorder %s224, %s238
    %p240 = scmp.eq.s32.totalorder %s25, 0
    %p241 = por %p239, %p240
    %s243 = sadd.s32 %s242, 1
    %p246 = scmp.eq.s32.totalorder %s19, 1
    %p247 = scmp.ne.s32.totalorder %s242, %s244
    %p248 = scmp.eq.s32.totalorder %s19, 0
    %p249 = por %p247, %p248
    %p250 = scmp.ne.s32.totalorder %s242, %s244
    %p251 = scmp.eq.s32.totalorder %s24, 1
    %p252 = por %p250, %p251
    %p253 = scmp.ne.s32.totalorder %s244, %s245
    %p254 = scmp.eq.s32.totalorder %s24, 0
    %p255 = por %p253, %p254
    %p256 = scmp.ne.s32.totalorder %s244, %s245
    %p257 = scmp.eq.s32.totalorder %s25, 1
    %p258 = por %p256, %p257
    %p260 = scmp.ne.s32.totalorder %s245, %s259
    %p261 = scmp.eq.s32.totalorder %s25, 0
    %p262 = por %p260, %p261
    %s263 = ssub.s32 %s19, %s26
    %p264 = scmp.eq.s32.totalorder %s263, 0
    %s266 = sadd.s32 %s265, 1
    %s267 = scalar_select %p264, %s265, %s266
    %p270 = pneg %p264
    %p271 = scmp.eq.s32.totalorder %s19, 1
    %p272 = por %p270, %p271
    %p273 = scmp.ne.s32.totalorder %s265, %s268
    %p274 = scmp.eq.s32.totalorder %s19, 0
    %p275 = por %p273, %p274
    %p276 = scmp.ne.s32.totalorder %s265, %s268
    %p277 = scmp.eq.s32.totalorder %s24, 1
    %p278 = por %p276, %p277
    %p279 = scmp.ne.s32.totalorder %s268, %s269
    %p280 = scmp.eq.s32.totalorder %s24, 0
    %p281 = por %p279, %p280
    %p282 = scmp.ne.s32.totalorder %s268, %s269
    %p283 = scmp.eq.s32.totalorder %s25, 1
    %p284 = por %p282, %p283
    %p286 = scmp.ne.s32.totalorder %s269, %s285
    %p287 = scmp.eq.s32.totalorder %s25, 0
    %p288 = por %p286, %p287
    %p289 = scmp.le.s32.totalorder 1, %s19
    %p290 = scmp.lt.s32.totalorder %s19, 3
    %p291 = pnand %p289, %p290
    %p292 = pneg %p291
    // Predicated region
    $region9: #{tpu_custom_call.1} parent=5 // pred_check
      _
    $region10: #{tpu_custom_call.1} parent=5 // pred_check_branch
      %294 = sbr.rel (%p291) target = $region12
    $region11: #{tpu_custom_call.1} parent=5 // pred_region
      %s295 = ssub.s32 %s19, 1
      // Predicated region
      $region13: #{tpu_custom_call.1} parent=11 // pred_check
        %p296 = pneg %p66
      $region14: #{tpu_custom_call.1} parent=11 // pred_check_branch
        %298 = sbr.rel (%p296) target = $region16
      $region15: #{tpu_custom_call.1} parent=11 // pred_region
        _
      $region16: #{tpu_custom_call.1} parent=11 // pred_fallthru
        _
      // Predicated region
      $region17: #{tpu_custom_call.1} parent=11 // pred_check
        %p299 = pneg %p87
      $region18: #{tpu_custom_call.1} parent=11 // pred_check_branch
        %301 = sbr.rel (%p299) target = $region20
      $region19: #{tpu_custom_call.1} parent=11 // pred_region
        _
      $region20: #{tpu_custom_call.1} parent=11 // pred_fallthru
        _
      // Predicated region
      $region21: #{tpu_custom_call.1} parent=11 // pred_check
        %p302 = pneg %p108
      $region22: #{tpu_custom_call.1} parent=11 // pred_check_branch
        %304 = sbr.rel (%p302) target = $region24
      $region23: #{tpu_custom_call.1} parent=11 // pred_region
        _
      $region24: #{tpu_custom_call.1} parent=11 // pred_fallthru
        _
      // Predicated region
      $region25: #{tpu_custom_call.1} parent=11 // pred_check
        %p305 = pneg %p129
      $region26: #{tpu_custom_call.1} parent=11 // pred_check_branch
        %307 = sbr.rel (%p305) target = $region28
      $region27: #{tpu_custom_call.1} parent=11 // pred_region
        _
      $region28: #{tpu_custom_call.1} parent=11 // pred_fallthru
        _
      // Predicated region
      $region29: #{tpu_custom_call.1} parent=11 // pred_check
        %p308 = pneg %p150
      $region30: #{tpu_custom_call.1} parent=11 // pred_check_branch
        %310 = sbr.rel (%p308) target = $region32
      $region31: #{tpu_custom_call.1} parent=11 // pred_region
        _
      $region32: #{tpu_custom_call.1} parent=11 // pred_fallthru
        _
      // Predicated region
      $region33: #{tpu_custom_call.1} parent=11 // pred_check
        %p311 = pneg %p171
      $region34: #{tpu_custom_call.1} parent=11 // pred_check_branch
        %313 = sbr.rel (%p311) target = $region36
      $region35: #{tpu_custom_call.1} parent=11 // pred_region
        _
      $region36: #{tpu_custom_call.1} parent=11 // pred_fallthru
        _
      // Predicated region
      $region37: #{tpu_custom_call.1} parent=11 // pred_check
        %p314 = pneg %p192
      $region38: #{tpu_custom_call.1} parent=11 // pred_check_branch
        %316 = sbr.rel (%p314) target = $region40
      $region39: #{tpu_custom_call.1} parent=11 // pred_region
        _
      $region40: #{tpu_custom_call.1} parent=11 // pred_fallthru
        _
      // Predicated region
      $region41: #{tpu_custom_call.1} parent=11 // pred_check
        %p317 = pneg %p213
      $region42: #{tpu_custom_call.1} parent=11 // pred_check_branch
        %319 = sbr.rel (%p317) target = $region44
      $region43: #{tpu_custom_call.1} parent=11 // pred_region
        _
      $region44: #{tpu_custom_call.1} parent=11 // pred_fallthru
        _
      // Predicated region
      $region45: #{tpu_custom_call.1} parent=11 // pred_check
        %p320 = pneg %p234
      $region46: #{tpu_custom_call.1} parent=11 // pred_check_branch
        %322 = sbr.rel (%p320) target = $region48
      $region47: #{tpu_custom_call.1} parent=11 // pred_region
        _
      $region48: #{tpu_custom_call.1} parent=11 // pred_fallthru
        _
      // Predicated region
      $region49: #{tpu_custom_call.1} parent=11 // pred_check
        %p323 = pneg %p255
      $region50: #{tpu_custom_call.1} parent=11 // pred_check_branch
        %325 = sbr.rel (%p323) target = $region52
      $region51: #{tpu_custom_call.1} parent=11 // pred_region
        _
      $region52: #{tpu_custom_call.1} parent=11 // pred_fallthru
        _
    $region12: #{tpu_custom_call.1} parent=5 // pred_fallthru
      _
    %p326 = scmp.lt.s32.totalorder %s19, 2
    // Predicated region
    $region53: #{tpu_custom_call.1} parent=5 // pred_check
      %p327 = pneg %p326
    $region54: #{tpu_custom_call.1} parent=5 // pred_check_branch
      %329 = sbr.rel (%p327) target = $region56
    $region55: #{tpu_custom_call.1} parent=5 // pred_region
      // Predicated region
      $region57: #{tpu_custom_call.1} parent=55 // pred_check
        %p330 = pneg %p39
      $region58: #{tpu_custom_call.1} parent=55 // pred_check_branch
        %332 = sbr.rel (%p330) target = $region60
      $region59: #{tpu_custom_call.1} parent=55 // pred_region
        %p333 = scmp.lt.s32.totalorder %s19, 1
        %s334 = scalar_select %p333, %s19, 1
        %s335 = smul.addr %s334, 4
        %s336 = smul.addr %s335, 8
        %s337 = scalar_lea.vmem %s0, %s336
      $region60: #{tpu_custom_call.1} parent=55 // pred_fallthru
        _
    $region56: #{tpu_custom_call.1} parent=5 // pred_fallthru
      _
    %p338 = scmp.le.s32.totalorder 1, %s19
    %p339 = scmp.lt.s32.totalorder %s19, 3
    %p340 = pnand %p338, %p339
    %p341 = pneg %p340
    // Predicated region
    $region61: #{tpu_custom_call.1} parent=5 // pred_check
      _
    $region62: #{tpu_custom_call.1} parent=5 // pred_check_branch
      %343 = sbr.rel (%p340) target = $region64
    $region63: #{tpu_custom_call.1} parent=5 // pred_region
      %s344 = ssub.s32 %s19, 1
      %p345 = scmp.lt.s32.totalorder %s24, 1
      %s346 = scalar_select %p345, %s24, 1
      %s347 = smul.addr %s346, 4
      %s348 = smul.addr %s347, 8
      %s349 = scalar_lea.vmem %s0, %s348
      %p350 = pneg %p45
      %p351 = pneg %p42
      %p352 = pneg %p66
      %p353 = pneg %p63
      %p354 = pneg %p87
      %p355 = pneg %p84
      %p356 = pneg %p108
      %p357 = pneg %p105
      %p358 = pneg %p129
      %p359 = pneg %p126
      %p360 = pneg %p150
      %p361 = pneg %p147
      %p362 = pneg %p171
      %p363 = pneg %p168
      %p364 = pneg %p192
      %p365 = pneg %p189
      %p366 = pneg %p213
      %p367 = pneg %p210
      %p368 = pneg %p234
      %p369 = pneg %p231
      %p370 = pneg %p255
      %p371 = pneg %p252
      %p372 = pneg %p281
      %p373 = pneg %p278
      %p374 = scmp.lt.s32.totalorder %s24, 1
      %s375 = scalar_select %p374, %s24, 1
      %s376 = scalar_lea.vmem %s11, %s375
      %p377 = scmp.lt.s32.totalorder %s24, 1
      %s378 = scalar_select %p377, %s24, 1
      %s379 = smul.addr %s378, 4
      %s380 = smul.addr %s379, 8
      %s381 = scalar_lea.vmem %s0, %s380
      %p382 = scmp.lt.s32.totalorder %s24, 1
      %s383 = scalar_select %p382, %s24, 1
      %s384 = scalar_lea.vmem %s11, %s383
      %v385 = vld [vmem:[%s381] sm:$0xff]
      %v386 = vld [vmem:[%s381 + $0x8] sm:$0xff]
      %v387 = vld [vmem:[%s381 + $0x10] sm:$0xff]
      %v388 = vld [vmem:[%s381 + $0x18] sm:$0xf]
      %vm393 = vcmask 1046528
      %v394 = vrot.slane %v385, 1
      %v395 = vrot.slane %v386, 1
      %v396 = vsel %vm393, %v394, %v395
      %v397 = vrot.slane %v387, 1
      %v398 = vsel %vm393, %v395, %v397
      %v399 = vrot.slane %v388, 1
      %v400 = vsel %vm393, %v397, %v399
      %401 = vrot.lane.b32.xlu0 %v396, 28
      %v402 = vpop.permute.xlu0 %401
      %403 = vrot.lane.b32.xlu0 %v398, 28
      %v404 = vpop.permute.xlu0 %403
      %405 = vrot.lane.b32.xlu0 %v400, 28
      %v406 = vpop.permute.xlu0 %405
      %407 = vrot.lane.b32.xlu0 %v399, 28
      %v408 = vpop.permute.xlu0 %407
      %vm413 = vcmask 1045504
      %v414 = vrot.slane %v385, 2
      %v415 = vrot.slane %v386, 2
      %v416 = vsel %vm413, %v414, %v415
      %v417 = vrot.slane %v387, 2
      %v418 = vsel %vm413, %v415, %v417
      %v419 = vrot.slane %v388, 2
      %v420 = vsel %vm413, %v417, %v419
      %421 = vrot.lane.b32.xlu0 %v416, 56
      %v422 = vpop.permute.xlu0 %421
      %423 = vrot.lane.b32.xlu0 %v418, 56
      %v424 = vpop.permute.xlu0 %423
      %425 = vrot.lane.b32.xlu0 %v420, 56
      %v426 = vpop.permute.xlu0 %425
      %427 = vrot.lane.b32.xlu0 %v419, 56
      %v428 = vpop.permute.xlu0 %427
      %vm433 = vcmask 228352
      %v434 = vsel %vm433, %v385, %v402
      %v435 = vsel %vm433, %v386, %v404
      %v436 = vsel %vm433, %v387, %v406
      %v437 = vsel %vm433, %v388, %v408
      %vm438 = vcmask 457728
      %v439 = vsel %vm438, %v434, %v422
      %v440 = vsel %vm438, %v435, %v424
      %v441 = vsel %vm438, %v436, %v426
      %v442 = vsel %vm438, %v437, %v428
      %v443 = vld [vmem:[%s1] sm:$0xff]
      %v444 = vld [vmem:[%s1 + $0x8] sm:$0xff]
      %v445 = vld [vmem:[%s1 + $0x10] sm:$0xff]
      %v446 = vld [vmem:[%s1 + $0x18] sm:$0xff]
      %v447 = vld [vmem:[%s1 + $0x20] sm:$0xff]
      %v448 = vld [vmem:[%s1 + $0x28] sm:$0xff]
      %v449 = vld [vmem:[%s1 + $0x30] sm:$0xff]
      %v450 = vld [vmem:[%s1 + $0x38] sm:$0xff]
      %v451 = vld [vmem:[%s1 + $0x40] sm:$0xff]
      %v452 = vld [vmem:[%s1 + $0x48] sm:$0xff]
      %v453 = vld [vmem:[%s1 + $0x50] sm:$0xff]
      %v454 = vld [vmem:[%s1 + $0x58] sm:$0xff]
      %v455 = vld [vmem:[%s1 + $0x60] sm:$0xff]
      %v456 = vld [vmem:[%s1 + $0x68] sm:$0xff]
      %v457 = vld [vmem:[%s1 + $0x70] sm:$0xff]
      %v458 = vld [vmem:[%s1 + $0x78] sm:$0xff]
      %v459 = vld [vmem:[%s1 + $0x80] sm:$0xff]
      %v460 = vld [vmem:[%s1 + $0x88] sm:$0xff]
      %v461 = vld [vmem:[%s1 + $0x90] sm:$0xff]
      %v462 = vld [vmem:[%s1 + $0x98] sm:$0xff]
      %v463 = vld [vmem:[%s1 + $0xa0] sm:$0xf]
      %v464 = vld [vmem:[%s1 + $0xa8] sm:$0xf]
      %v465 = vld [vmem:[%s6] sm:$0x3]
      %v467 = vlaneseq
      %v468 = vshrl.u32 %v467, 7
      %v469 = vsub.s32 0, %v468
      %v470 = vrot.slane %v465, %v469
      %v471 = vlaneseq
      %v472 = vshrl.u32 %v471, 7
      %v473 = vsub.s32 1, %v472
      %v474 = vrot.slane %v465, %v473
      %vm477 = vcmask 687104
      %v479 = vsel %vm477, %v439, 0
      %v482 = vsel %vm477, %v440, 0
      %v485 = vsel %vm477, %v441, 0
      %v488 = vsel %vm477, %v442, 0
      %vm490 = vcmask 1043456
      %v492 = vsel %vm490, %v463, 0
      %v495 = vsel %vm490, %v464, 0
      %497 = vmatprep.subr.mxu0 0.0
      %498 = vmatpush1.msra.mxu0 0.0
      %499 = vmatprep.subr.mxu0 0.0
      %500 = vmatpush1.msra.mxu0 0.0
      %501 = vmatprep.subr.mxu0 0.0
      %502 = vmatpush1.msra.mxu0 0.0
      %503 = vmatprep.subr.mxu0 0.0
      %504 = vmatpush1.msra.mxu0 0.0
      %505 = vmatprep.subr.mxu0 0.0
      %506 = vmatpush1.msra.mxu0 0.0
      %507 = vmatprep.subr.mxu0 %v495
      %508 = vmatpush1.msra.mxu0 %v492
      %509 = vmatprep.subr.mxu0 %v462
      %510 = vmatpush1.msra.mxu0 %v461
      %511 = vmatprep.subr.mxu0 %v460
      %512 = vmatpush1.msra.mxu0 %v459
      %513 = vmatprep.subr.mxu0 %v458
      %514 = vmatpush1.msra.mxu0 %v457
      %515 = vmatprep.subr.mxu0 %v456
      %516 = vmatpush1.msra.mxu0 %v455
      %517 = vmatprep.subr.mxu0 %v454
      %518 = vmatpush1.msra.mxu0 %v453
      %519 = vmatprep.subr.mxu0 %v452
      %520 = vmatpush1.msra.mxu0 %v451
      %521 = vmatprep.subr.mxu0 %v450
      %522 = vmatpush1.msra.mxu0 %v449
      %523 = vmatprep.subr.mxu0 %v448
      %524 = vmatpush1.msra.mxu0 %v447
      %525 = vmatprep.subr.mxu0 %v446
      %526 = vmatpush1.msra.mxu0 %v445
      %527 = vmatprep.subr.mxu0 %v444
      %528 = vmatpush1.msra.mxu0 %v443
      %529 = vmatprep.subr.mxu0 0.0
      %530 = vmatpush2.msra.mxu0 0.0
      %531 = vmatprep.subr.mxu0 0.0
      %532 = vmatpush2.msra.mxu0 0.0
      %533 = vmatprep.subr.mxu0 0.0
      %534 = vmatpush2.msra.mxu0 0.0
      %535 = vmatprep.subr.mxu0 0.0
      %536 = vmatpush2.msra.mxu0 0.0
      %537 = vmatprep.subr.mxu0 0.0
      %538 = vmatpush2.msra.mxu0 0.0
      %539 = vmatprep.subr.mxu0 0.0
      %540 = vmatpush2.msra.mxu0 0.0
      %541 = vmatprep.subr.mxu0 0.0
      %542 = vmatpush2.msra.mxu0 0.0
      %543 = vmatprep.subr.mxu0 0.0
      %544 = vmatpush2.msra.mxu0 0.0
      %545 = vmatprep.subr.mxu0 0.0
      %546 = vmatpush2.msra.mxu0 0.0
      %547 = vmatprep.subr.mxu0 0.0
      %548 = vmatpush2.msra.mxu0 0.0
      %549 = vmatprep.subr.mxu0 0.0
      %550 = vmatpush2.msra.mxu0 0.0
      %551 = vmatprep.subr.mxu0 0.0
      %552 = vmatpush2.msra.mxu0 0.0
      %553 = vmatprep.subr.mxu0 0.0
      %554 = vmatpush2.msra.mxu0 0.0
      %555 = vmatprep.subr.mxu0 0.0
      %556 = vmatpush2.msra.mxu0 0.0
      %557 = vmatprep.subr.mxu0 0.0
      %558 = vmatpush2.msra.mxu0 0.0
      %559 = vmatprep.subr.mxu0 0.0
      %560 = vmatpush2.msra.mxu0 0.0
      %561 = vmatprep.mubr.f32.mxu0 0.0
      %562 = vmatmul.mubr.f32.gmra.mxu0 %v479
      %v563 = vpop.f32.mrf.mxu0
      %v564 = vadd.f32 %v470, %v563
      %v565 = vpop.f32.mrf.mxu0
      %v566 = vadd.f32 %v474, %v565
      %567 = vmatprep.mubr.f32.mxu0 0.0
      %568 = vmatmul.mubr.f32.gmra.mxu0 %v482
      %v569 = vpop.f32.mrf.mxu0
      %v570 = vadd.f32 %v470, %v569
      %v571 = vpop.f32.mrf.mxu0
      %v572 = vadd.f32 %v474, %v571
      %573 = vmatprep.mubr.f32.mxu0 0.0
      %574 = vmatmul.mubr.f32.gmra.mxu0 %v485
      %v575 = vpop.f32.mrf.mxu0
      %v576 = vadd.f32 %v470, %v575
      %v577 = vpop.f32.mrf.mxu0
      %v578 = vadd.f32 %v474, %v577
      %579 = vmatprep.mubr.f32.mxu0 0.0
      %580 = vmatmul.mubr.f32.gmra.mxu0 %v488
      %v581 = vpop.f32.mrf.mxu0
      %v582 = vadd.f32 %v470, %v581
      %v583 = vpop.f32.mrf.mxu0
      %v584 = vadd.f32 %v474, %v583
      %585 = vdwg.mxu0
      %v592 = vrot.slane %v564, 1
      %v593 = vrot.slane %v570, 1
      %v594 = vsel %vm393, %v592, %v593
      %v595 = vrot.slane %v566, 1
      %v596 = vrot.slane %v572, 1
      %v597 = vsel %vm393, %v595, %v596
      %v598 = vrot.slane %v576, 1
      %v599 = vsel %vm393, %v593, %v598
      %v600 = vrot.slane %v578, 1
      %v601 = vsel %vm393, %v596, %v600
      %602 = vrot.lane.b32.xlu0 %v594, 80
      %v603 = vpop.permute.xlu0 %602
      %604 = vrot.lane.b32.xlu0 %v597, 80
      %v605 = vpop.permute.xlu0 %604
      %606 = vrot.lane.b32.xlu0 %v599, 80
      %v607 = vpop.permute.xlu0 %606
      %608 = vrot.lane.b32.xlu0 %v601, 80
      %v609 = vpop.permute.xlu0 %608
      %610 = vrot.lane.b32.xlu0 %v598, 80
      %v611 = vpop.permute.xlu0 %610
      %612 = vrot.lane.b32.xlu0 %v600, 80
      %v613 = vpop.permute.xlu0 %612
      %vm614 = vcmask 654336
      %v615 = vsel %vm614, %v603, %v605
      %v616 = vsel %vm614, %v607, %v609
      %v617 = vsel %vm614, %v611, %v613
      %v628 = vrot.slane %v564, 2
      %v629 = vrot.slane %v570, 2
      %v630 = vsel %vm413, %v628, %v629
      %v631 = vrot.slane %v566, 2
      %v632 = vrot.slane %v572, 2
      %v633 = vsel %vm413, %v631, %v632
      %v634 = vrot.slane %v576, 2
      %v635 = vsel %vm413, %v629, %v634
      %v636 = vrot.slane %v578, 2
      %v637 = vsel %vm413, %v632, %v636
      %v638 = vrot.slane %v582, 2
      %v639 = vsel %vm413, %v634, %v638
      %v640 = vrot.slane %v584, 2
      %v641 = vsel %vm413, %v636, %v640
      %642 = vrot.lane.b32.xlu0 %v630, 32
      %v643 = vpop.permute.xlu0 %642
      %644 = vrot.lane.b32.xlu0 %v633, 32
      %v645 = vpop.permute.xlu0 %644
      %646 = vrot.lane.b32.xlu0 %v635, 32
      %v647 = vpop.permute.xlu0 %646
      %648 = vrot.lane.b32.xlu0 %v637, 32
      %v649 = vpop.permute.xlu0 %648
      %650 = vrot.lane.b32.xlu0 %v639, 32
      %v651 = vpop.permute.xlu0 %650
      %652 = vrot.lane.b32.xlu0 %v641, 32
      %v653 = vpop.permute.xlu0 %652
      %vm654 = vcmask 261120
      %v655 = vsel %vm654, %v643, %v645
      %v656 = vsel %vm654, %v647, %v649
      %v657 = vsel %vm654, %v651, %v653
      %v663 = vsel %vm614, %v566, %v603
      %v664 = vsel %vm614, %v572, %v607
      %v665 = vsel %vm614, %v578, %v611
      %v666 = vsel %vm654, %v605, %v643
      %v667 = vsel %vm654, %v609, %v647
      %v668 = vsel %vm654, %v613, %v651
      %v669 = vlaneseq
      %v670 = vshrl.u32 %v669, 7
      %v671 = vadd.s32 %v670, 8
      %v672 = vlaneseq
      %v673 = vand.u32 %v672, 127
      %v674 = vmul.u32 %v670, 2
      %v675 = vmul.u32 %v671, 2
      %vm676 = vcmp.eq.s32.totalorder %v673, %v674
      %vm677 = vcmp.eq.s32.totalorder %v673, %v675
      %v678 = vsel %vm676, 1.0, 0.0
      %v679 = vsel %vm677, 1.0, 0.0
      %vm680 = vcmask 187392
      %v682 = vsel %vm680, %v678, 0
      %v685 = vsel %vm680, %v679, 0
      %v687 = vsel %vm393, %v576, 0
      %v690 = vsel %vm393, %v665, 0
      %v692 = vsel %vm393, %v617, 0
      %v695 = vsel %vm393, %v668, 0
      %v697 = vsel %vm393, %v657, 0
      %699 = vmatprep.subr.mxu0 0.0
      %700 = vmatpush1.msra.mxu0 0.0
      %701 = vmatprep.subr.mxu0 0.0
      %702 = vmatpush1.msra.mxu0 0.0
      %703 = vmatprep.subr.mxu0 0.0
      %704 = vmatpush1.msra.mxu0 0.0
      %705 = vmatprep.subr.mxu0 0.0
      %706 = vmatpush1.msra.mxu0 0.0
      %707 = vmatprep.subr.mxu0 0.0
      %708 = vmatpush1.msra.mxu0 0.0
      %709 = vmatprep.subr.mxu0 0.0
      %710 = vmatpush1.msra.mxu0 0.0
      %711 = vmatprep.subr.mxu0 0.0
      %712 = vmatpush1.msra.mxu0 0.0
      %713 = vmatprep.subr.mxu0 0.0
      %714 = vmatpush1.msra.mxu0 0.0
      %715 = vmatprep.subr.mxu0 0.0
      %716 = vmatpush1.msra.mxu0 0.0
      %717 = vmatprep.subr.mxu0 0.0
      %718 = vmatpush1.msra.mxu0 0.0
      %719 = vmatprep.subr.mxu0 0.0
      %720 = vmatpush1.msra.mxu0 0.0
      %721 = vmatprep.subr.mxu0 0.0
      %722 = vmatpush1.msra.mxu0 0.0
      %723 = vmatprep.subr.mxu0 0.0
      %724 = vmatpush1.msra.mxu0 0.0
      %725 = vmatprep.subr.mxu0 %v690
      %726 = vmatpush1.msra.mxu0 %v687
      %727 = vmatprep.subr.mxu0 %v664
      %728 = vmatpush1.msra.mxu0 %v570
      %729 = vmatprep.subr.mxu0 %v663
      %730 = vmatpush1.msra.mxu0 %v564
      %731 = vmatprep.subr.mxu0 0.0
      %732 = vmatpush2.msra.mxu0 0.0
      %733 = vmatprep.subr.mxu0 0.0
      %734 = vmatpush2.msra.mxu0 0.0
      %735 = vmatprep.subr.mxu0 0.0
      %736 = vmatpush2.msra.mxu0 0.0
      %737 = vmatprep.subr.mxu0 0.0
      %738 = vmatpush2.msra.mxu0 0.0
      %739 = vmatprep.subr.mxu0 0.0
      %740 = vmatpush2.msra.mxu0 0.0
      %741 = vmatprep.subr.mxu0 0.0
      %742 = vmatpush2.msra.mxu0 0.0
      %743 = vmatprep.subr.mxu0 0.0
      %744 = vmatpush2.msra.mxu0 0.0
      %745 = vmatprep.subr.mxu0 0.0
      %746 = vmatpush2.msra.mxu0 0.0
      %747 = vmatprep.subr.mxu0 0.0
      %748 = vmatpush2.msra.mxu0 0.0
      %749 = vmatprep.subr.mxu0 0.0
      %750 = vmatpush2.msra.mxu0 0.0
      %751 = vmatprep.subr.mxu0 0.0
      %752 = vmatpush2.msra.mxu0 0.0
      %753 = vmatprep.subr.mxu0 0.0
      %754 = vmatpush2.msra.mxu0 0.0
      %755 = vmatprep.subr.mxu0 0.0
      %756 = vmatpush2.msra.mxu0 0.0
      %757 = vmatprep.subr.mxu0 0.0
      %758 = vmatpush2.msra.mxu0 0.0
      %759 = vmatprep.subr.mxu0 0.0
      %760 = vmatpush2.msra.mxu0 0.0
      %761 = vmatprep.subr.mxu0 0.0
      %762 = vmatpush2.msra.mxu0 0.0
      %763 = vmatprep.mubr.f32.mxu0 0.0
      %764 = vmatmul.mubr.f32.gmra.mxu0 %v682
      %v765 = vpop.f32.mrf.mxu0
      %v766 = vadd.f32 0.0, %v765
      %v767 = vpop.f32.mrf.mxu0
      %v768 = vadd.f32 0.0, %v767
      %769 = vmatprep.mubr.f32.mxu0 0.0
      %770 = vmatmul.mubr.f32.gmra.mxu0 %v685
      %v771 = vpop.f32.mrf.mxu0
      %v772 = vadd.f32 0.0, %v771
      %v773 = vpop.f32.mrf.mxu0
      %v774 = vadd.f32 0.0, %v773
      %775 = vdwg.mxu0
      %776 = vmatprep.subr.mxu0 0.0
      %777 = vmatpush1.msra.mxu0 0.0
      %778 = vmatprep.subr.mxu0 0.0
      %779 = vmatpush1.msra.mxu0 0.0
      %780 = vmatprep.subr.mxu0 0.0
      %781 = vmatpush1.msra.mxu0 0.0
      %782 = vmatprep.subr.mxu0 0.0
      %783 = vmatpush1.msra.mxu0 0.0
      %784 = vmatprep.subr.mxu0 0.0
      %785 = vmatpush1.msra.mxu0 0.0
      %786 = vmatprep.subr.mxu0 0.0
      %787 = vmatpush1.msra.mxu0 0.0
      %788 = vmatprep.subr.mxu0 0.0
      %789 = vmatpush1.msra.mxu0 0.0
      %790 = vmatprep.subr.mxu0 0.0
      %791 = vmatpush1.msra.mxu0 0.0
      %792 = vmatprep.subr.mxu0 0.0
      %793 = vmatpush1.msra.mxu0 0.0
      %794 = vmatprep.subr.mxu0 0.0
      %795 = vmatpush1.msra.mxu0 0.0
      %796 = vmatprep.subr.mxu0 0.0
      %797 = vmatpush1.msra.mxu0 0.0
      %798 = vmatprep.subr.mxu0 0.0
      %799 = vmatpush1.msra.mxu0 0.0
      %800 = vmatprep.subr.mxu0 0.0
      %801 = vmatpush1.msra.mxu0 0.0
      %802 = vmatprep.subr.mxu0 %v695
      %803 = vmatpush1.msra.mxu0 %v692
      %804 = vmatprep.subr.mxu0 %v667
      %805 = vmatpush1.msra.mxu0 %v616
      %806 = vmatprep.subr.mxu0 %v666
      %807 = vmatpush1.msra.mxu0 %v615
      %808 = vmatprep.subr.mxu0 0.0
      %809 = vmatpush2.msra.mxu0 0.0
      %810 = vmatprep.subr.mxu0 0.0
      %811 = vmatpush2.msra.mxu0 0.0
      %812 = vmatprep.subr.mxu0 0.0
      %813 = vmatpush2.msra.mxu0 0.0
      %814 = vmatprep.subr.mxu0 0.0
      %815 = vmatpush2.msra.mxu0 0.0
      %816 = vmatprep.subr.mxu0 0.0
      %817 = vmatpush2.msra.mxu0 0.0
      %818 = vmatprep.subr.mxu0 0.0
      %819 = vmatpush2.msra.mxu0 0.0
      %820 = vmatprep.subr.mxu0 0.0
      %821 = vmatpush2.msra.mxu0 0.0
      %822 = vmatprep.subr.mxu0 0.0
      %823 = vmatpush2.msra.mxu0 0.0
      %824 = vmatprep.subr.mxu0 0.0
      %825 = vmatpush2.msra.mxu0 0.0
      %826 = vmatprep.subr.mxu0 0.0
      %827 = vmatpush2.msra.mxu0 0.0
      %828 = vmatprep.subr.mxu0 0.0
      %829 = vmatpush2.msra.mxu0 0.0
      %830 = vmatprep.subr.mxu0 0.0
      %831 = vmatpush2.msra.mxu0 0.0
      %832 = vmatprep.subr.mxu0 0.0
      %833 = vmatpush2.msra.mxu0 0.0
      %834 = vmatprep.subr.mxu0 0.0
      %835 = vmatpush2.msra.mxu0 0.0
      %836 = vmatprep.subr.mxu0 0.0
      %837 = vmatpush2.msra.mxu0 0.0
      %838 = vmatprep.subr.mxu0 0.0
      %839 = vmatpush2.msra.mxu0 0.0
      %840 = vmatprep.mubr.f32.mxu0 0.0
      %841 = vmatmul.mubr.f32.gmra.mxu0 %v682
      %v842 = vpop.f32.mrf.mxu0
      %v843 = vadd.f32 0.0, %v842
      %v844 = vpop.f32.mrf.mxu0
      %v845 = vadd.f32 0.0, %v844
      %846 = vmatprep.mubr.f32.mxu0 0.0
      %847 = vmatmul.mubr.f32.gmra.mxu0 %v685
      %v848 = vpop.f32.mrf.mxu0
      %v849 = vadd.f32 0.0, %v848
      %v850 = vpop.f32.mrf.mxu0
      %v851 = vadd.f32 0.0, %v850
      %852 = vdwg.mxu0
      %853 = vmatprep.subr.mxu0 0.0
      %854 = vmatpush1.msra.mxu0 0.0
      %855 = vmatprep.subr.mxu0 0.0
      %856 = vmatpush1.msra.mxu0 0.0
      %857 = vmatprep.subr.mxu0 0.0
      %858 = vmatpush1.msra.mxu0 0.0
      %859 = vmatprep.subr.mxu0 0.0
      %860 = vmatpush1.msra.mxu0 0.0
      %861 = vmatprep.subr.mxu0 0.0
      %862 = vmatpush1.msra.mxu0 0.0
      %863 = vmatprep.subr.mxu0 0.0
      %864 = vmatpush1.msra.mxu0 0.0
      %865 = vmatprep.subr.mxu0 0.0
      %866 = vmatpush1.msra.mxu0 0.0
      %867 = vmatprep.subr.mxu0 0.0
      %868 = vmatpush1.msra.mxu0 0.0
      %869 = vmatprep.subr.mxu0 0.0
      %870 = vmatpush1.msra.mxu0 0.0
      %871 = vmatprep.subr.mxu0 0.0
      %872 = vmatpush1.msra.mxu0 0.0
      %873 = vmatprep.subr.mxu0 0.0
      %874 = vmatpush1.msra.mxu0 0.0
      %875 = vmatprep.subr.mxu0 0.0
      %876 = vmatpush1.msra.mxu0 0.0
      %877 = vmatprep.subr.mxu0 0.0
      %878 = vmatpush1.msra.mxu0 0.0
      %879 = vmatprep.subr.mxu0 0.0
      %880 = vmatpush1.msra.mxu0 %v697
      %881 = vmatprep.subr.mxu0 0.0
      %882 = vmatpush1.msra.mxu0 %v656
      %883 = vmatprep.subr.mxu0 0.0
      %884 = vmatpush1.msra.mxu0 %v655
      %885 = vmatprep.subr.mxu0 0.0
      %886 = vmatpush2.msra.mxu0 0.0
      %887 = vmatprep.subr.mxu0 0.0
      %888 = vmatpush2.msra.mxu0 0.0
      %889 = vmatprep.subr.mxu0 0.0
      %890 = vmatpush2.msra.mxu0 0.0
      %891 = vmatprep.subr.mxu0 0.0
      %892 = vmatpush2.msra.mxu0 0.0
      %893 = vmatprep.subr.mxu0 0.0
      %894 = vmatpush2.msra.mxu0 0.0
      %895 = vmatprep.subr.mxu0 0.0
      %896 = vmatpush2.msra.mxu0 0.0
      %897 = vmatprep.subr.mxu0 0.0
      %898 = vmatpush2.msra.mxu0 0.0
      %899 = vmatprep.subr.mxu0 0.0
      %900 = vmatpush2.msra.mxu0 0.0
      %901 = vmatprep.subr.mxu0 0.0
      %902 = vmatpush2.msra.mxu0 0.0
      %903 = vmatprep.subr.mxu0 0.0
      %904 = vmatpush2.msra.mxu0 0.0
      %905 = vmatprep.subr.mxu0 0.0
      %906 = vmatpush2.msra.mxu0 0.0
      %907 = vmatprep.subr.mxu0 0.0
      %908 = vmatpush2.msra.mxu0 0.0
      %909 = vmatprep.subr.mxu0 0.0
      %910 = vmatpush2.msra.mxu0 0.0
      %911 = vmatprep.subr.mxu0 0.0
      %912 = vmatpush2.msra.mxu0 0.0
      %913 = vmatprep.subr.mxu0 0.0
      %914 = vmatpush2.msra.mxu0 0.0
      %915 = vmatprep.subr.mxu0 0.0
      %916 = vmatpush2.msra.mxu0 0.0
      %917 = vmatprep.mubr.f32.mxu0 0.0
      %918 = vmatmul.mubr.f32.gmra.mxu0 %v682
      %v919 = vpop.f32.mrf.mxu0
      %v920 = vadd.f32 0.0, %v919
      %v921 = vpop.f32.mrf.mxu0
      %922 = vmatprep.mubr.f32.mxu0 0.0
      %923 = vmatmul.mubr.f32.gmra.mxu0 %v685
      %v924 = vpop.f32.mrf.mxu0
      %v925 = vadd.f32 0.0, %v924
      %v926 = vpop.f32.mrf.mxu0
      %927 = vdwg.mxu0
      %v928 = vld [vmem:[%s2] sm:$0xff]
      %v929 = vld [vmem:[%s2 + $0x8] sm:$0xff]
      %v930 = vld [vmem:[%s2 + $0x10] sm:$0xff]
      %v931 = vld [vmem:[%s2 + $0x18] sm:$0xff]
      %v932 = vld [vmem:[%s2 + $0x20] sm:$0xff]
      %v933 = vld [vmem:[%s2 + $0x28] sm:$0xff]
      %v934 = vld [vmem:[%s2 + $0x30] sm:$0xff]
      %v935 = vld [vmem:[%s2 + $0x38] sm:$0xff]
      %v936 = vld [vmem:[%s2 + $0x40] sm:$0xff]
      %v937 = vld [vmem:[%s2 + $0x48] sm:$0xff]
      %v938 = vld [vmem:[%s2 + $0x50] sm:$0xff]
      %v939 = vld [vmem:[%s2 + $0x58] sm:$0xff]
      %v940 = vld [vmem:[%s2 + $0x60] sm:$0xff]
      %v941 = vld [vmem:[%s2 + $0x68] sm:$0xff]
      %v942 = vld [vmem:[%s2 + $0x70] sm:$0xff]
      %v943 = vld [vmem:[%s2 + $0x78] sm:$0xff]
      %v944 = vld [vmem:[%s2 + $0x80] sm:$0xff]
      %v945 = vld [vmem:[%s2 + $0x88] sm:$0xff]
      %v946 = vld [vmem:[%s2 + $0x90] sm:$0xff]
      %v947 = vld [vmem:[%s2 + $0x98] sm:$0xff]
      %v948 = vld [vmem:[%s2 + $0xa0] sm:$0xff]
      %v949 = vld [vmem:[%s2 + $0xa8] sm:$0xff]
      %v950 = vld [vmem:[%s2 + $0xb0] sm:$0xff]
      %v951 = vld [vmem:[%s2 + $0xb8] sm:$0xff]
      %v952 = vld [vmem:[%s2 + $0xc0] sm:$0xff]
      %v953 = vld [vmem:[%s2 + $0xc8] sm:$0xff]
      %v954 = vld [vmem:[%s2 + $0xd0] sm:$0xff]
      %v955 = vld [vmem:[%s2 + $0xd8] sm:$0xff]
      %v956 = vld [vmem:[%s2 + $0xe0] sm:$0xff]
      %v957 = vld [vmem:[%s2 + $0xe8] sm:$0xff]
      %v958 = vld [vmem:[%s2 + $0xf0] sm:$0xff]
      %v959 = vld [vmem:[%s2 + $0xf8] sm:$0xff]
      %v960 = vld [vmem:[%s2 + $0x100] sm:$0xff]
      %v961 = vld [vmem:[%s2 + $0x108] sm:$0xff]
      %v962 = vld [vmem:[%s2 + $0x110] sm:$0xff]
      %v963 = vld [vmem:[%s2 + $0x118] sm:$0xff]
      %v964 = vld [vmem:[%s2 + $0x120] sm:$0xff]
      %v965 = vld [vmem:[%s2 + $0x128] sm:$0xff]
      %v966 = vld [vmem:[%s2 + $0x130] sm:$0xff]
      %v967 = vld [vmem:[%s2 + $0x138] sm:$0xff]
      %v968 = vld [vmem:[%s2 + $0x140] sm:$0xff]
      %v969 = vld [vmem:[%s2 + $0x148] sm:$0xff]
      %v970 = vld [vmem:[%s2 + $0x150] sm:$0xff]
      %v971 = vld [vmem:[%s2 + $0x158] sm:$0xff]
      %v972 = vld [vmem:[%s2 + $0x160] sm:$0xff]
      %v973 = vld [vmem:[%s2 + $0x168] sm:$0xff]
      %v974 = vld [vmem:[%s2 + $0x170] sm:$0xff]
      %v975 = vld [vmem:[%s2 + $0x178] sm:$0xff]
      %v976 = vld [vmem:[%s2 + $0x180] sm:$0xff]
      %v977 = vld [vmem:[%s2 + $0x188] sm:$0xff]
      %v978 = vld [vmem:[%s2 + $0x190] sm:$0xff]
      %v979 = vld [vmem:[%s2 + $0x198] sm:$0xff]
      %v980 = vld [vmem:[%s2 + $0x1a0] sm:$0xff]
      %v981 = vld [vmem:[%s2 + $0x1a8] sm:$0xff]
      %v982 = vld [vmem:[%s2 + $0x1b0] sm:$0xff]
      %v983 = vld [vmem:[%s2 + $0x1b8] sm:$0xff]
      %v984 = vld [vmem:[%s2 + $0x1c0] sm:$0xff]
      %v985 = vld [vmem:[%s2 + $0x1c8] sm:$0xff]
      %v986 = vld [vmem:[%s2 + $0x1d0] sm:$0xff]
      %v987 = vld [vmem:[%s2 + $0x1d8] sm:$0xff]
      %v988 = vld [vmem:[%s2 + $0x1e0] sm:$0xff]
      %v989 = vld [vmem:[%s2 + $0x1e8] sm:$0xff]
      %v990 = vld [vmem:[%s2 + $0x1f0] sm:$0xff]
      %v991 = vld [vmem:[%s2 + $0x1f8] sm:$0xff]
      %v992 = vld [vmem:[%s2 + $0x200] sm:$0xff]
      %v993 = vld [vmem:[%s2 + $0x208] sm:$0xff]
      %v994 = vld [vmem:[%s2 + $0x210] sm:$0xff]
      %v995 = vld [vmem:[%s2 + $0x218] sm:$0xff]
      %v996 = vld [vmem:[%s2 + $0x220] sm:$0xff]
      %v997 = vld [vmem:[%s2 + $0x228] sm:$0xff]
      %v998 = vld [vmem:[%s2 + $0x230] sm:$0xff]
      %v999 = vld [vmem:[%s2 + $0x238] sm:$0xff]
      %v1000 = vld [vmem:[%s2 + $0x240] sm:$0xff]
      %v1001 = vld [vmem:[%s2 + $0x248] sm:$0xff]
      %v1002 = vld [vmem:[%s2 + $0x250] sm:$0xff]
      %v1003 = vld [vmem:[%s2 + $0x258] sm:$0xff]
      %v1004 = vld [vmem:[%s2 + $0x260] sm:$0xff]
      %v1005 = vld [vmem:[%s2 + $0x268] sm:$0xff]
      %v1006 = vld [vmem:[%s7] sm:$0x1]
      %v1008 = vlaneseq
      %v1009 = vshrl.u32 %v1008, 7
      %v1010 = vsub.s32 0, %v1009
      %v1011 = vrot.slane %v1006, %v1010
      %vm1013 = vcmask 916480
      %v1015 = vsel %vm1013, %v920, 0
      %v1018 = vsel %vm1013, %v925, 0
      %1020 = vmatprep.subr.mxu0 0.0
      %1021 = vmatpush1.msra.mxu0 %v943
      %1022 = vmatprep.subr.mxu0 0.0
      %1023 = vmatpush1.msra.mxu0 %v942
      %1024 = vmatprep.subr.mxu0 0.0
      %1025 = vmatpush1.msra.mxu0 %v941
      %1026 = vmatprep.subr.mxu0 0.0
      %1027 = vmatpush1.msra.mxu0 %v940
      %1028 = vmatprep.subr.mxu0 0.0
      %1029 = vmatpush1.msra.mxu0 %v939
      %1030 = vmatprep.subr.mxu0 0.0
      %1031 = vmatpush1.msra.mxu0 %v938
      %1032 = vmatprep.subr.mxu0 0.0
      %1033 = vmatpush1.msra.mxu0 %v937
      %1034 = vmatprep.subr.mxu0 0.0
      %1035 = vmatpush1.msra.mxu0 %v936
      %1036 = vmatprep.subr.mxu0 0.0
      %1037 = vmatpush1.msra.mxu0 %v935
      %1038 = vmatprep.subr.mxu0 0.0
      %1039 = vmatpush1.msra.mxu0 %v934
      %1040 = vmatprep.subr.mxu0 0.0
      %1041 = vmatpush1.msra.mxu0 %v933
      %1042 = vmatprep.subr.mxu0 0.0
      %1043 = vmatpush1.msra.mxu0 %v932
      %1044 = vmatprep.subr.mxu0 0.0
      %1045 = vmatpush1.msra.mxu0 %v931
      %1046 = vmatprep.subr.mxu0 0.0
      %1047 = vmatpush1.msra.mxu0 %v930
      %1048 = vmatprep.subr.mxu0 0.0
      %1049 = vmatpush1.msra.mxu0 %v929
      %1050 = vmatprep.subr.mxu0 0.0
      %1051 = vmatpush1.msra.mxu0 %v928
      %1052 = vmatprep.subr.mxu0 0.0
      %1053 = vmatpush2.msra.mxu0 %v959
      %1054 = vmatprep.subr.mxu0 0.0
      %1055 = vmatpush2.msra.mxu0 %v958
      %1056 = vmatprep.subr.mxu0 0.0
      %1057 = vmatpush2.msra.mxu0 %v957
      %1058 = vmatprep.subr.mxu0 0.0
      %1059 = vmatpush2.msra.mxu0 %v956
      %1060 = vmatprep.subr.mxu0 0.0
      %1061 = vmatpush2.msra.mxu0 %v955
      %1062 = vmatprep.subr.mxu0 0.0
      %1063 = vmatpush2.msra.mxu0 %v954
      %1064 = vmatprep.subr.mxu0 0.0
      %1065 = vmatpush2.msra.mxu0 %v953
      %1066 = vmatprep.subr.mxu0 0.0
      %1067 = vmatpush2.msra.mxu0 %v952
      %1068 = vmatprep.subr.mxu0 0.0
      %1069 = vmatpush2.msra.mxu0 %v951
      %1070 = vmatprep.subr.mxu0 0.0
      %1071 = vmatpush2.msra.mxu0 %v950
      %1072 = vmatprep.subr.mxu0 0.0
      %1073 = vmatpush2.msra.mxu0 %v949
      %1074 = vmatprep.subr.mxu0 0.0
      %1075 = vmatpush2.msra.mxu0 %v948
      %1076 = vmatprep.subr.mxu0 0.0
      %1077 = vmatpush2.msra.mxu0 %v947
      %1078 = vmatprep.subr.mxu0 0.0
      %1079 = vmatpush2.msra.mxu0 %v946
      %1080 = vmatprep.subr.mxu0 0.0
      %1081 = vmatpush2.msra.mxu0 %v945
      %1082 = vmatprep.subr.mxu0 0.0
      %1083 = vmatpush2.msra.mxu0 %v944
      %1084 = vmatprep.mubr.f32.mxu0 %v768
      %1085 = vmatmul.mubr.f32.gmra.mxu0 %v766
      %v1086 = vpop.f32.mrf.mxu0
      %v1087 = vadd.f32 %v1011, %v1086
      %v1088 = vpop.f32.mrf.mxu0
      %1089 = vmatprep.mubr.f32.mxu0 %v774
      %1090 = vmatmul.mubr.f32.gmra.mxu0 %v772
      %v1091 = vpop.f32.mrf.mxu0
      %v1092 = vadd.f32 %v1011, %v1091
      %v1093 = vpop.f32.mrf.mxu0
      %1094 = vdwg.mxu0
      %1095 = vmatprep.subr.mxu0 0.0
      %1096 = vmatpush1.msra.mxu0 %v975
      %1097 = vmatprep.subr.mxu0 0.0
      %1098 = vmatpush1.msra.mxu0 %v974
      %1099 = vmatprep.subr.mxu0 0.0
      %1100 = vmatpush1.msra.mxu0 %v973
      %1101 = vmatprep.subr.mxu0 0.0
      %1102 = vmatpush1.msra.mxu0 %v972
      %1103 = vmatprep.subr.mxu0 0.0
      %1104 = vmatpush1.msra.mxu0 %v971
      %1105 = vmatprep.subr.mxu0 0.0
      %1106 = vmatpush1.msra.mxu0 %v970
      %1107 = vmatprep.subr.mxu0 0.0
      %1108 = vmatpush1.msra.mxu0 %v969
      %1109 = vmatprep.subr.mxu0 0.0
      %1110 = vmatpush1.msra.mxu0 %v968
      %1111 = vmatprep.subr.mxu0 0.0
      %1112 = vmatpush1.msra.mxu0 %v967
      %1113 = vmatprep.subr.mxu0 0.0
      %1114 = vmatpush1.msra.mxu0 %v966
      %1115 = vmatprep.subr.mxu0 0.0
      %1116 = vmatpush1.msra.mxu0 %v965
      %1117 = vmatprep.subr.mxu0 0.0
      %1118 = vmatpush1.msra.mxu0 %v964
      %1119 = vmatprep.subr.mxu0 0.0
      %1120 = vmatpush1.msra.mxu0 %v963
      %1121 = vmatprep.subr.mxu0 0.0
      %1122 = vmatpush1.msra.mxu0 %v962
      %1123 = vmatprep.subr.mxu0 0.0
      %1124 = vmatpush1.msra.mxu0 %v961
      %1125 = vmatprep.subr.mxu0 0.0
      %1126 = vmatpush1.msra.mxu0 %v960
      %1127 = vmatprep.subr.mxu0 0.0
      %1128 = vmatpush2.msra.mxu0 %v991
      %1129 = vmatprep.subr.mxu0 0.0
      %1130 = vmatpush2.msra.mxu0 %v990
      %1131 = vmatprep.subr.mxu0 0.0
      %1132 = vmatpush2.msra.mxu0 %v989
      %1133 = vmatprep.subr.mxu0 0.0
      %1134 = vmatpush2.msra.mxu0 %v988
      %1135 = vmatprep.subr.mxu0 0.0
      %1136 = vmatpush2.msra.mxu0 %v987
      %1137 = vmatprep.subr.mxu0 0.0
      %1138 = vmatpush2.msra.mxu0 %v986
      %1139 = vmatprep.subr.mxu0 0.0
      %1140 = vmatpush2.msra.mxu0 %v985
      %1141 = vmatprep.subr.mxu0 0.0
      %1142 = vmatpush2.msra.mxu0 %v984
      %1143 = vmatprep.subr.mxu0 0.0
      %1144 = vmatpush2.msra.mxu0 %v983
      %1145 = vmatprep.subr.mxu0 0.0
      %1146 = vmatpush2.msra.mxu0 %v982
      %1147 = vmatprep.subr.mxu0 0.0
      %1148 = vmatpush2.msra.mxu0 %v981
      %1149 = vmatprep.subr.mxu0 0.0
      %1150 = vmatpush2.msra.mxu0 %v980
      %1151 = vmatprep.subr.mxu0 0.0
      %1152 = vmatpush2.msra.mxu0 %v979
      %1153 = vmatprep.subr.mxu0 0.0
      %1154 = vmatpush2.msra.mxu0 %v978
      %1155 = vmatprep.subr.mxu0 0.0
      %1156 = vmatpush2.msra.mxu0 %v977
      %1157 = vmatprep.subr.mxu0 0.0
      %1158 = vmatpush2.msra.mxu0 %v976
      %1159 = vmatprep.mubr.f32.mxu0 %v845
      %1160 = vmatmul.mubr.f32.gmra.mxu0 %v843
      %v1161 = vpop.f32.mrf.mxu0
      %v1162 = vadd.f32 %v1087, %v1161
      %v1163 = vpop.f32.mrf.mxu0
      %1164 = vmatprep.mubr.f32.mxu0 %v851
      %1165 = vmatmul.mubr.f32.gmra.mxu0 %v849
      %v1166 = vpop.f32.mrf.mxu0
      %v1167 = vadd.f32 %v1092, %v1166
      %v1168 = vpop.f32.mrf.mxu0
      %1169 = vdwg.mxu0
      %1170 = vmatprep.subr.mxu0 0.0
      %1171 = vmatpush1.msra.mxu0 0.0
      %1172 = vmatprep.subr.mxu0 0.0
      %1173 = vmatpush1.msra.mxu0 0.0
      %1174 = vmatprep.subr.mxu0 0.0
      %1175 = vmatpush1.msra.mxu0 %v1005
      %1176 = vmatprep.subr.mxu0 0.0
      %1177 = vmatpush1.msra.mxu0 %v1004
      %1178 = vmatprep.subr.mxu0 0.0
      %1179 = vmatpush1.msra.mxu0 %v1003
      %1180 = vmatprep.subr.mxu0 0.0
      %1181 = vmatpush1.msra.mxu0 %v1002
      %1182 = vmatprep.subr.mxu0 0.0
      %1183 = vmatpush1.msra.mxu0 %v1001
      %1184 = vmatprep.subr.mxu0 0.0
      %1185 = vmatpush1.msra.mxu0 %v1000
      %1186 = vmatprep.subr.mxu0 0.0
      %1187 = vmatpush1.msra.mxu0 %v999
      %1188 = vmatprep.subr.mxu0 0.0
      %1189 = vmatpush1.msra.mxu0 %v998
      %1190 = vmatprep.subr.mxu0 0.0
      %1191 = vmatpush1.msra.mxu0 %v997
      %1192 = vmatprep.subr.mxu0 0.0
      %1193 = vmatpush1.msra.mxu0 %v996
      %1194 = vmatprep.subr.mxu0 0.0
      %1195 = vmatpush1.msra.mxu0 %v995
      %1196 = vmatprep.subr.mxu0 0.0
      %1197 = vmatpush1.msra.mxu0 %v994
      %1198 = vmatprep.subr.mxu0 0.0
      %1199 = vmatpush1.msra.mxu0 %v993
      %1200 = vmatprep.subr.mxu0 0.0
      %1201 = vmatpush1.msra.mxu0 %v992
      %1202 = vmatprep.subr.mxu0 0.0
      %1203 = vmatpush2.msra.mxu0 0.0
      %1204 = vmatprep.subr.mxu0 0.0
      %1205 = vmatpush2.msra.mxu0 0.0
      %1206 = vmatprep.subr.mxu0 0.0
      %1207 = vmatpush2.msra.mxu0 0.0
      %1208 = vmatprep.subr.mxu0 0.0
      %1209 = vmatpush2.msra.mxu0 0.0
      %1210 = vmatprep.subr.mxu0 0.0
      %1211 = vmatpush2.msra.mxu0 0.0
      %1212 = vmatprep.subr.mxu0 0.0
      %1213 = vmatpush2.msra.mxu0 0.0
      %1214 = vmatprep.subr.mxu0 0.0
      %1215 = vmatpush2.msra.mxu0 0.0
      %1216 = vmatprep.subr.mxu0 0.0
      %1217 = vmatpush2.msra.mxu0 0.0
      %1218 = vmatprep.subr.mxu0 0.0
      %1219 = vmatpush2.msra.mxu0 0.0
      %1220 = vmatprep.subr.mxu0 0.0
      %1221 = vmatpush2.msra.mxu0 0.0
      %1222 = vmatprep.subr.mxu0 0.0
      %1223 = vmatpush2.msra.mxu0 0.0
      %1224 = vmatprep.subr.mxu0 0.0
      %1225 = vmatpush2.msra.mxu0 0.0
      %1226 = vmatprep.subr.mxu0 0.0
      %1227 = vmatpush2.msra.mxu0 0.0
      %1228 = vmatprep.subr.mxu0 0.0
      %1229 = vmatpush2.msra.mxu0 0.0
      %1230 = vmatprep.subr.mxu0 0.0
      %1231 = vmatpush2.msra.mxu0 0.0
      %1232 = vmatprep.subr.mxu0 0.0
      %1233 = vmatpush2.msra.mxu0 0.0
      %1234 = vmatprep.mubr.f32.mxu0 0.0
      %1235 = vmatmul.mubr.f32.gmra.mxu0 %v1015
      %v1236 = vpop.f32.mrf.mxu0
      %v1237 = vadd.f32 %v1162, %v1236
      %v1238 = vpop.f32.mrf.mxu0
      %1239 = vmatprep.mubr.f32.mxu0 0.0
      %1240 = vmatmul.mubr.f32.gmra.mxu0 %v1018
      %v1241 = vpop.f32.mrf.mxu0
      %v1242 = vadd.f32 %v1167, %v1241
      %v1243 = vpop.f32.mrf.mxu0
      %1244 = vdwg.mxu0
      %vm1245 = vcmp.ge.f32.partialorder %v1237, 0.0
      %vm1246 = vcmp.ge.f32.partialorder %v1242, 0.0
      %v1247 = vmul.f32 %v1237, 0.2
      %v1248 = vmul.f32 %v1242, 0.2
      %v1249 = vsel %vm1245, %v1237, %v1247
      %v1250 = vsel %vm1246, %v1242, %v1248
      %v1253 = vrot.slane %v1249, 1
      %v1254 = vrot.slane %v1250, 1
      %v1255 = vsel %vm393, %v1253, %v1254
      %1256 = vrot.lane.b32.xlu0 %v1255, 96
      %v1257 = vpop.permute.xlu0 %1256
      %1258 = vrot.lane.b32.xlu0 %v1254, 96
      %v1259 = vpop.permute.xlu0 %1258
      %v1262 = vrot.slane %v1249, 2
      %v1263 = vrot.slane %v1250, 2
      %v1264 = vsel %vm413, %v1262, %v1263
      %1265 = vrot.lane.b32.xlu0 %v1264, 64
      %v1266 = vpop.permute.xlu0 %1265
      %1267 = vrot.lane.b32.xlu0 %v1263, 64
      %v1268 = vpop.permute.xlu0 %1267
      %vm1271 = vcmask 785408
      %v1272 = vsel %vm1271, %v1249, %v1257
      %v1273 = vsel %vm1271, %v1250, %v1259
      %vm1274 = vcmask 523264
      %v1275 = vsel %vm1274, %v1257, %v1266
      %v1276 = vsel %vm1274, %v1259, %v1268
      %v1277 = vld [vmem:[%s3] sm:$0xff]
      %v1278 = vld [vmem:[%s3 + $0x8] sm:$0xff]
      %v1279 = vld [vmem:[%s3 + $0x10] sm:$0xff]
      %v1280 = vld [vmem:[%s3 + $0x18] sm:$0xff]
      %v1281 = vld [vmem:[%s3 + $0x20] sm:$0xff]
      %v1282 = vld [vmem:[%s3 + $0x28] sm:$0xff]
      %v1283 = vld [vmem:[%s3 + $0x30] sm:$0xff]
      %v1284 = vld [vmem:[%s3 + $0x38] sm:$0xff]
      %v1285 = vld [vmem:[%s3 + $0x40] sm:$0xff]
      %v1286 = vld [vmem:[%s3 + $0x48] sm:$0xff]
      %v1287 = vld [vmem:[%s3 + $0x50] sm:$0xff]
      %v1288 = vld [vmem:[%s3 + $0x58] sm:$0xff]
      %v1289 = vld [vmem:[%s3 + $0x60] sm:$0xff]
      %v1290 = vld [vmem:[%s3 + $0x68] sm:$0xff]
      %v1291 = vld [vmem:[%s3 + $0x70] sm:$0xff]
      %v1292 = vld [vmem:[%s3 + $0x78] sm:$0xff]
      %v1293 = vld [vmem:[%s3 + $0x80] sm:$0xff]
      %v1294 = vld [vmem:[%s3 + $0x88] sm:$0xff]
      %v1295 = vld [vmem:[%s3 + $0x90] sm:$0xff]
      %v1296 = vld [vmem:[%s3 + $0x98] sm:$0xff]
      %v1297 = vld [vmem:[%s3 + $0xa0] sm:$0xff]
      %v1298 = vld [vmem:[%s3 + $0xa8] sm:$0xff]
      %v1299 = vld [vmem:[%s3 + $0xb0] sm:$0xff]
      %v1300 = vld [vmem:[%s3 + $0xb8] sm:$0xff]
      %v1301 = vld [vmem:[%s3 + $0xc0] sm:$0xff]
      %v1302 = vld [vmem:[%s3 + $0xc8] sm:$0xff]
      %v1303 = vld [vmem:[%s3 + $0xd0] sm:$0xff]
      %v1304 = vld [vmem:[%s3 + $0xd8] sm:$0xff]
      %v1305 = vld [vmem:[%s3 + $0xe0] sm:$0xff]
      %v1306 = vld [vmem:[%s3 + $0xe8] sm:$0xff]
      %v1307 = vld [vmem:[%s3 + $0xf0] sm:$0xff]
      %v1308 = vld [vmem:[%s3 + $0xf8] sm:$0xff]
      %v1309 = vld [vmem:[%s3 + $0x100] sm:$0xff]
      %v1310 = vld [vmem:[%s3 + $0x108] sm:$0xff]
      %v1311 = vld [vmem:[%s3 + $0x110] sm:$0xff]
      %v1312 = vld [vmem:[%s3 + $0x118] sm:$0xff]
      %v1313 = vld [vmem:[%s3 + $0x120] sm:$0xff]
      %v1314 = vld [vmem:[%s3 + $0x128] sm:$0xff]
      %v1315 = vld [vmem:[%s3 + $0x130] sm:$0xff]
      %v1316 = vld [vmem:[%s3 + $0x138] sm:$0xff]
      %v1317 = vld [vmem:[%s3 + $0x140] sm:$0xff]
      %v1318 = vld [vmem:[%s3 + $0x148] sm:$0xff]
      %v1319 = vld [vmem:[%s3 + $0x150] sm:$0xff]
      %v1320 = vld [vmem:[%s3 + $0x158] sm:$0xff]
      %v1321 = vld [vmem:[%s3 + $0x160] sm:$0xff]
      %v1322 = vld [vmem:[%s3 + $0x168] sm:$0xff]
      %v1323 = vld [vmem:[%s3 + $0x170] sm:$0xff]
      %v1324 = vld [vmem:[%s3 + $0x178] sm:$0xff]
      %v1325 = vld [vmem:[%s3 + $0x180] sm:$0xff]
      %v1326 = vld [vmem:[%s3 + $0x188] sm:$0xff]
      %v1327 = vld [vmem:[%s3 + $0x190] sm:$0xff]
      %v1328 = vld [vmem:[%s3 + $0x198] sm:$0xff]
      %v1329 = vld [vmem:[%s3 + $0x1a0] sm:$0xff]
      %v1330 = vld [vmem:[%s3 + $0x1a8] sm:$0xff]
      %v1331 = vld [vmem:[%s3 + $0x1b0] sm:$0xff]
      %v1332 = vld [vmem:[%s3 + $0x1b8] sm:$0xff]
      %v1333 = vld [vmem:[%s3 + $0x1c0] sm:$0xff]
      %v1334 = vld [vmem:[%s3 + $0x1c8] sm:$0xff]
      %v1335 = vld [vmem:[%s3 + $0x1d0] sm:$0xff]
      %v1336 = vld [vmem:[%s3 + $0x1d8] sm:$0xff]
      %v1337 = vld [vmem:[%s3 + $0x1e0] sm:$0xff]
      %v1338 = vld [vmem:[%s3 + $0x1e8] sm:$0xff]
      %v1339 = vld [vmem:[%s3 + $0x1f0] sm:$0xff]
      %v1340 = vld [vmem:[%s3 + $0x1f8] sm:$0xff]
      %v1341 = vld [vmem:[%s3 + $0x200] sm:$0xff]
      %v1342 = vld [vmem:[%s3 + $0x208] sm:$0xff]
      %v1343 = vld [vmem:[%s3 + $0x210] sm:$0xff]
      %v1344 = vld [vmem:[%s3 + $0x218] sm:$0xff]
      %v1345 = vld [vmem:[%s3 + $0x220] sm:$0xff]
      %v1346 = vld [vmem:[%s3 + $0x228] sm:$0xff]
      %v1347 = vld [vmem:[%s3 + $0x230] sm:$0xff]
      %v1348 = vld [vmem:[%s3 + $0x238] sm:$0xff]
      %v1349 = vld [vmem:[%s8] sm:$0x3]
      %v1351 = vlaneseq
      %v1352 = vshrl.u32 %v1351, 7
      %v1353 = vsub.s32 0, %v1352
      %v1354 = vrot.slane %v1349, %v1353
      %v1355 = vlaneseq
      %v1356 = vshrl.u32 %v1355, 7
      %v1357 = vsub.s32 1, %v1356
      %v1358 = vrot.slane %v1349, %v1357
      %v1361 = vsel %vm654, %v1266, 0
      %v1363 = vsel %vm654, %v1268, 0
      %1365 = vmatprep.subr.mxu0 %v1308
      %1366 = vmatpush1.msra.mxu0 %v1307
      %1367 = vmatprep.subr.mxu0 %v1306
      %1368 = vmatpush1.msra.mxu0 %v1305
      %1369 = vmatprep.subr.mxu0 %v1304
      %1370 = vmatpush1.msra.mxu0 %v1303
      %1371 = vmatprep.subr.mxu0 %v1302
      %1372 = vmatpush1.msra.mxu0 %v1301
      %1373 = vmatprep.subr.mxu0 %v1300
      %1374 = vmatpush1.msra.mxu0 %v1299
      %1375 = vmatprep.subr.mxu0 %v1298
      %1376 = vmatpush1.msra.mxu0 %v1297
      %1377 = vmatprep.subr.mxu0 %v1296
      %1378 = vmatpush1.msra.mxu0 %v1295
      %1379 = vmatprep.subr.mxu0 %v1294
      %1380 = vmatpush1.msra.mxu0 %v1293
      %1381 = vmatprep.subr.mxu0 %v1292
      %1382 = vmatpush1.msra.mxu0 %v1291
      %1383 = vmatprep.subr.mxu0 %v1290
      %1384 = vmatpush1.msra.mxu0 %v1289
      %1385 = vmatprep.subr.mxu0 %v1288
      %1386 = vmatpush1.msra.mxu0 %v1287
      %1387 = vmatprep.subr.mxu0 %v1286
      %1388 = vmatpush1.msra.mxu0 %v1285
      %1389 = vmatprep.subr.mxu0 %v1284
      %1390 = vmatpush1.msra.mxu0 %v1283
      %1391 = vmatprep.subr.mxu0 %v1282
      %1392 = vmatpush1.msra.mxu0 %v1281
      %1393 = vmatprep.subr.mxu0 %v1280
      %1394 = vmatpush1.msra.mxu0 %v1279
      %1395 = vmatprep.subr.mxu0 %v1278
      %1396 = vmatpush1.msra.mxu0 %v1277
      %1397 = vmatprep.subr.mxu0 %v1340
      %1398 = vmatpush2.msra.mxu0 %v1339
      %1399 = vmatprep.subr.mxu0 %v1338
      %1400 = vmatpush2.msra.mxu0 %v1337
      %1401 = vmatprep.subr.mxu0 %v1336
      %1402 = vmatpush2.msra.mxu0 %v1335
      %1403 = vmatprep.subr.mxu0 %v1334
      %1404 = vmatpush2.msra.mxu0 %v1333
      %1405 = vmatprep.subr.mxu0 %v1332
      %1406 = vmatpush2.msra.mxu0 %v1331
      %1407 = vmatprep.subr.mxu0 %v1330
      %1408 = vmatpush2.msra.mxu0 %v1329
      %1409 = vmatprep.subr.mxu0 %v1328
      %1410 = vmatpush2.msra.mxu0 %v1327
      %1411 = vmatprep.subr.mxu0 %v1326
      %1412 = vmatpush2.msra.mxu0 %v1325
      %1413 = vmatprep.subr.mxu0 %v1324
      %1414 = vmatpush2.msra.mxu0 %v1323
      %1415 = vmatprep.subr.mxu0 %v1322
      %1416 = vmatpush2.msra.mxu0 %v1321
      %1417 = vmatprep.subr.mxu0 %v1320
      %1418 = vmatpush2.msra.mxu0 %v1319
      %1419 = vmatprep.subr.mxu0 %v1318
      %1420 = vmatpush2.msra.mxu0 %v1317
      %1421 = vmatprep.subr.mxu0 %v1316
      %1422 = vmatpush2.msra.mxu0 %v1315
      %1423 = vmatprep.subr.mxu0 %v1314
      %1424 = vmatpush2.msra.mxu0 %v1313
      %1425 = vmatprep.subr.mxu0 %v1312
      %1426 = vmatpush2.msra.mxu0 %v1311
      %1427 = vmatprep.subr.mxu0 %v1310
      %1428 = vmatpush2.msra.mxu0 %v1309
      %1429 = vmatprep.mubr.f32.mxu0 %v1275
      %1430 = vmatmul.mubr.f32.gmra.mxu0 %v1272
      %v1431 = vpop.f32.mrf.mxu0
      %v1432 = vadd.f32 %v1354, %v1431
      %v1433 = vpop.f32.mrf.mxu0
      %v1434 = vadd.f32 %v1358, %v1433
      %1435 = vmatprep.mubr.f32.mxu0 %v1276
      %1436 = vmatmul.mubr.f32.gmra.mxu0 %v1273
      %v1437 = vpop.f32.mrf.mxu0
      %v1438 = vadd.f32 %v1354, %v1437
      %v1439 = vpop.f32.mrf.mxu0
      %v1440 = vadd.f32 %v1358, %v1439
      %1441 = vdwg.mxu0
      %1442 = vmatprep.subr.mxu0 0.0
      %1443 = vmatpush1.msra.mxu0 0.0
      %1444 = vmatprep.subr.mxu0 0.0
      %1445 = vmatpush1.msra.mxu0 0.0
      %1446 = vmatprep.subr.mxu0 0.0
      %1447 = vmatpush1.msra.mxu0 0.0
      %1448 = vmatprep.subr.mxu0 0.0
      %1449 = vmatpush1.msra.mxu0 0.0
      %1450 = vmatprep.subr.mxu0 0.0
      %1451 = vmatpush1.msra.mxu0 0.0
      %1452 = vmatprep.subr.mxu0 0.0
      %1453 = vmatpush1.msra.mxu0 0.0
      %1454 = vmatprep.subr.mxu0 0.0
      %1455 = vmatpush1.msra.mxu0 0.0
      %1456 = vmatprep.subr.mxu0 0.0
      %1457 = vmatpush1.msra.mxu0 0.0
      %1458 = vmatprep.subr.mxu0 0.0
      %1459 = vmatpush1.msra.mxu0 0.0
      %1460 = vmatprep.subr.mxu0 0.0
      %1461 = vmatpush1.msra.mxu0 0.0
      %1462 = vmatprep.subr.mxu0 0.0
      %1463 = vmatpush1.msra.mxu0 0.0
      %1464 = vmatprep.subr.mxu0 0.0
      %1465 = vmatpush1.msra.mxu0 0.0
      %1466 = vmatprep.subr.mxu0 %v1348
      %1467 = vmatpush1.msra.mxu0 %v1347
      %1468 = vmatprep.subr.mxu0 %v1346
      %1469 = vmatpush1.msra.mxu0 %v1345
      %1470 = vmatprep.subr.mxu0 %v1344
      %1471 = vmatpush1.msra.mxu0 %v1343
      %1472 = vmatprep.subr.mxu0 %v1342
      %1473 = vmatpush1.msra.mxu0 %v1341
      %1474 = vmatprep.subr.mxu0 0.0
      %1475 = vmatpush2.msra.mxu0 0.0
      %1476 = vmatprep.subr.mxu0 0.0
      %1477 = vmatpush2.msra.mxu0 0.0
      %1478 = vmatprep.subr.mxu0 0.0
      %1479 = vmatpush2.msra.mxu0 0.0
      %1480 = vmatprep.subr.mxu0 0.0
      %1481 = vmatpush2.msra.mxu0 0.0
      %1482 = vmatprep.subr.mxu0 0.0
      %1483 = vmatpush2.msra.mxu0 0.0
      %1484 = vmatprep.subr.mxu0 0.0
      %1485 = vmatpush2.msra.mxu0 0.0
      %1486 = vmatprep.subr.mxu0 0.0
      %1487 = vmatpush2.msra.mxu0 0.0
      %1488 = vmatprep.subr.mxu0 0.0
      %1489 = vmatpush2.msra.mxu0 0.0
      %1490 = vmatprep.subr.mxu0 0.0
      %1491 = vmatpush2.msra.mxu0 0.0
      %1492 = vmatprep.subr.mxu0 0.0
      %1493 = vmatpush2.msra.mxu0 0.0
      %1494 = vmatprep.subr.mxu0 0.0
      %1495 = vmatpush2.msra.mxu0 0.0
      %1496 = vmatprep.subr.mxu0 0.0
      %1497 = vmatpush2.msra.mxu0 0.0
      %1498 = vmatprep.subr.mxu0 0.0
      %1499 = vmatpush2.msra.mxu0 0.0
      %1500 = vmatprep.subr.mxu0 0.0
      %1501 = vmatpush2.msra.mxu0 0.0
      %1502 = vmatprep.subr.mxu0 0.0
      %1503 = vmatpush2.msra.mxu0 0.0
      %1504 = vmatprep.subr.mxu0 0.0
      %1505 = vmatpush2.msra.mxu0 0.0
      %1506 = vmatprep.mubr.f32.mxu0 0.0
      %1507 = vmatmul.mubr.f32.gmra.mxu0 %v1361
      %v1508 = vpop.f32.mrf.mxu0
      %v1509 = vadd.f32 %v1432, %v1508
      %v1510 = vpop.f32.mrf.mxu0
      %v1511 = vadd.f32 %v1434, %v1510
      %1512 = vmatprep.mubr.f32.mxu0 0.0
      %1513 = vmatmul.mubr.f32.gmra.mxu0 %v1363
      %v1514 = vpop.f32.mrf.mxu0
      %v1515 = vadd.f32 %v1438, %v1514
      %v1516 = vpop.f32.mrf.mxu0
      %v1517 = vadd.f32 %v1440, %v1516
      %1518 = vdwg.mxu0
      %v1521 = vrot.slane %v1509, 1
      %v1522 = vrot.slane %v1511, 1
      %1523 = vrot.lane.b32.xlu0 %v1521, 32
      %v1524 = vpop.permute.xlu0 %1523
      %1525 = vrot.lane.b32.xlu0 %v1522, 32
      %v1526 = vpop.permute.xlu0 %1525
      %v1527 = vsel %vm654, %v1524, %v1526
      %v1532 = vrot.slane %v1509, 2
      %v1533 = vrot.slane %v1515, 2
      %v1534 = vsel %vm413, %v1532, %v1533
      %v1535 = vrot.slane %v1511, 2
      %v1536 = vrot.slane %v1517, 2
      %v1537 = vsel %vm413, %v1535, %v1536
      %1538 = vrot.lane.b32.xlu0 %v1534, 64
      %v1539 = vpop.permute.xlu0 %1538
      %1540 = vrot.lane.b32.xlu0 %v1537, 64
      %v1541 = vpop.permute.xlu0 %1540
      %v1542 = vsel %vm1274, %v1539, %v1541
      %v1544 = vsel %vm654, %v1511, %v1524
      %v1545 = vsel %vm1274, %v1527, %v1539
      %vm1546 = vcmask 56320
      %v1547 = vsel %vm1546, %v678, 0
      %v1549 = vsel %vm393, %v1509, 0
      %v1552 = vsel %vm393, %v1544, 0
      %v1555 = vsel %vm393, %v1545, 0
      %v1557 = vsel %vm393, %v1542, 0
      %1559 = vmatprep.subr.mxu0 0.0
      %1560 = vmatpush1.msra.mxu0 0.0
      %1561 = vmatprep.subr.mxu0 0.0
      %1562 = vmatpush1.msra.mxu0 0.0
      %1563 = vmatprep.subr.mxu0 0.0
      %1564 = vmatpush1.msra.mxu0 0.0
      %1565 = vmatprep.subr.mxu0 0.0
      %1566 = vmatpush1.msra.mxu0 0.0
      %1567 = vmatprep.subr.mxu0 0.0
      %1568 = vmatpush1.msra.mxu0 0.0
      %1569 = vmatprep.subr.mxu0 0.0
      %1570 = vmatpush1.msra.mxu0 0.0
      %1571 = vmatprep.subr.mxu0 0.0
      %1572 = vmatpush1.msra.mxu0 0.0
      %1573 = vmatprep.subr.mxu0 0.0
      %1574 = vmatpush1.msra.mxu0 0.0
      %1575 = vmatprep.subr.mxu0 0.0
      %1576 = vmatpush1.msra.mxu0 0.0
      %1577 = vmatprep.subr.mxu0 0.0
      %1578 = vmatpush1.msra.mxu0 0.0
      %1579 = vmatprep.subr.mxu0 0.0
      %1580 = vmatpush1.msra.mxu0 0.0
      %1581 = vmatprep.subr.mxu0 0.0
      %1582 = vmatpush1.msra.mxu0 0.0
      %1583 = vmatprep.subr.mxu0 0.0
      %1584 = vmatpush1.msra.mxu0 0.0
      %1585 = vmatprep.subr.mxu0 0.0
      %1586 = vmatpush1.msra.mxu0 0.0
      %1587 = vmatprep.subr.mxu0 0.0
      %1588 = vmatpush1.msra.mxu0 0.0
      %1589 = vmatprep.subr.mxu0 %v1552
      %1590 = vmatpush1.msra.mxu0 %v1549
      %1591 = vmatprep.subr.mxu0 0.0
      %1592 = vmatpush2.msra.mxu0 0.0
      %1593 = vmatprep.subr.mxu0 0.0
      %1594 = vmatpush2.msra.mxu0 0.0
      %1595 = vmatprep.subr.mxu0 0.0
      %1596 = vmatpush2.msra.mxu0 0.0
      %1597 = vmatprep.subr.mxu0 0.0
      %1598 = vmatpush2.msra.mxu0 0.0
      %1599 = vmatprep.subr.mxu0 0.0
      %1600 = vmatpush2.msra.mxu0 0.0
      %1601 = vmatprep.subr.mxu0 0.0
      %1602 = vmatpush2.msra.mxu0 0.0
      %1603 = vmatprep.subr.mxu0 0.0
      %1604 = vmatpush2.msra.mxu0 0.0
      %1605 = vmatprep.subr.mxu0 0.0
      %1606 = vmatpush2.msra.mxu0 0.0
      %1607 = vmatprep.subr.mxu0 0.0
      %1608 = vmatpush2.msra.mxu0 0.0
      %1609 = vmatprep.subr.mxu0 0.0
      %1610 = vmatpush2.msra.mxu0 0.0
      %1611 = vmatprep.subr.mxu0 0.0
      %1612 = vmatpush2.msra.mxu0 0.0
      %1613 = vmatprep.subr.mxu0 0.0
      %1614 = vmatpush2.msra.mxu0 0.0
      %1615 = vmatprep.subr.mxu0 0.0
      %1616 = vmatpush2.msra.mxu0 0.0
      %1617 = vmatprep.subr.mxu0 0.0
      %1618 = vmatpush2.msra.mxu0 0.0
      %1619 = vmatprep.subr.mxu0 0.0
      %1620 = vmatpush2.msra.mxu0 0.0
      %1621 = vmatprep.subr.mxu0 0.0
      %1622 = vmatpush2.msra.mxu0 0.0
      %1623 = vmatprep.mubr.f32.mxu0 0.0
      %1624 = vmatmul.mubr.f32.gmra.mxu0 %v1547
      %v1625 = vpop.f32.mrf.mxu0
      %v1626 = vadd.f32 0.0, %v1625
      %v1627 = vpop.f32.mrf.mxu0
      %v1628 = vadd.f32 0.0, %v1627
      %1629 = vdwg.mxu0
      %1630 = vmatprep.subr.mxu0 0.0
      %1631 = vmatpush1.msra.mxu0 0.0
      %1632 = vmatprep.subr.mxu0 0.0
      %1633 = vmatpush1.msra.mxu0 0.0
      %1634 = vmatprep.subr.mxu0 0.0
      %1635 = vmatpush1.msra.mxu0 0.0
      %1636 = vmatprep.subr.mxu0 0.0
      %1637 = vmatpush1.msra.mxu0 0.0
      %1638 = vmatprep.subr.mxu0 0.0
      %1639 = vmatpush1.msra.mxu0 0.0
      %1640 = vmatprep.subr.mxu0 0.0
      %1641 = vmatpush1.msra.mxu0 0.0
      %1642 = vmatprep.subr.mxu0 0.0
      %1643 = vmatpush1.msra.mxu0 0.0
      %1644 = vmatprep.subr.mxu0 0.0
      %1645 = vmatpush1.msra.mxu0 0.0
      %1646 = vmatprep.subr.mxu0 0.0
      %1647 = vmatpush1.msra.mxu0 0.0
      %1648 = vmatprep.subr.mxu0 0.0
      %1649 = vmatpush1.msra.mxu0 0.0
      %1650 = vmatprep.subr.mxu0 0.0
      %1651 = vmatpush1.msra.mxu0 0.0
      %1652 = vmatprep.subr.mxu0 0.0
      %1653 = vmatpush1.msra.mxu0 0.0
      %1654 = vmatprep.subr.mxu0 0.0
      %1655 = vmatpush1.msra.mxu0 0.0
      %1656 = vmatprep.subr.mxu0 0.0
      %1657 = vmatpush1.msra.mxu0 0.0
      %1658 = vmatprep.subr.mxu0 0.0
      %1659 = vmatpush1.msra.mxu0 0.0
      %1660 = vmatprep.subr.mxu0 %v1557
      %1661 = vmatpush1.msra.mxu0 %v1555
      %1662 = vmatprep.subr.mxu0 0.0
      %1663 = vmatpush2.msra.mxu0 0.0
      %1664 = vmatprep.subr.mxu0 0.0
      %1665 = vmatpush2.msra.mxu0 0.0
      %1666 = vmatprep.subr.mxu0 0.0
      %1667 = vmatpush2.msra.mxu0 0.0
      %1668 = vmatprep.subr.mxu0 0.0
      %1669 = vmatpush2.msra.mxu0 0.0
      %1670 = vmatprep.subr.mxu0 0.0
      %1671 = vmatpush2.msra.mxu0 0.0
      %1672 = vmatprep.subr.mxu0 0.0
      %1673 = vmatpush2.msra.mxu0 0.0
      %1674 = vmatprep.subr.mxu0 0.0
      %1675 = vmatpush2.msra.mxu0 0.0
      %1676 = vmatprep.subr.mxu0 0.0
      %1677 = vmatpush2.msra.mxu0 0.0
      %1678 = vmatprep.subr.mxu0 0.0
      %1679 = vmatpush2.msra.mxu0 0.0
      %1680 = vmatprep.subr.mxu0 0.0
      %1681 = vmatpush2.msra.mxu0 0.0
      %1682 = vmatprep.subr.mxu0 0.0
      %1683 = vmatpush2.msra.mxu0 0.0
      %1684 = vmatprep.subr.mxu0 0.0
      %1685 = vmatpush2.msra.mxu0 0.0
      %1686 = vmatprep.subr.mxu0 0.0
      %1687 = vmatpush2.msra.mxu0 0.0
      %1688 = vmatprep.subr.mxu0 0.0
      %1689 = vmatpush2.msra.mxu0 0.0
      %1690 = vmatprep.subr.mxu0 0.0
      %1691 = vmatpush2.msra.mxu0 0.0
      %1692 = vmatprep.subr.mxu0 0.0
      %1693 = vmatpush2.msra.mxu0 0.0
      %1694 = vmatprep.mubr.f32.mxu0 0.0
      %1695 = vmatmul.mubr.f32.gmra.mxu0 %v1547
      %v1696 = vpop.f32.mrf.mxu0
      %v1697 = vadd.f32 0.0, %v1696
      %v1698 = vpop.f32.mrf.mxu0
      %v1699 = vadd.f32 0.0, %v1698
      %1700 = vdwg.mxu0
      %v1701 = vld [vmem:[%s4] sm:$0xff]
      %v1702 = vld [vmem:[%s4 + $0x8] sm:$0xff]
      %v1703 = vld [vmem:[%s4 + $0x10] sm:$0xff]
      %v1704 = vld [vmem:[%s4 + $0x18] sm:$0xff]
      %v1705 = vld [vmem:[%s4 + $0x20] sm:$0xff]
      %v1706 = vld [vmem:[%s4 + $0x28] sm:$0xff]
      %v1707 = vld [vmem:[%s4 + $0x30] sm:$0xff]
      %v1708 = vld [vmem:[%s4 + $0x38] sm:$0xff]
      %v1709 = vld [vmem:[%s4 + $0x40] sm:$0xff]
      %v1710 = vld [vmem:[%s4 + $0x48] sm:$0xff]
      %v1711 = vld [vmem:[%s4 + $0x50] sm:$0xff]
      %v1712 = vld [vmem:[%s4 + $0x58] sm:$0xff]
      %v1713 = vld [vmem:[%s4 + $0x60] sm:$0xff]
      %v1714 = vld [vmem:[%s4 + $0x68] sm:$0xff]
      %v1715 = vld [vmem:[%s4 + $0x70] sm:$0xff]
      %v1716 = vld [vmem:[%s4 + $0x78] sm:$0xff]
      %v1717 = vld [vmem:[%s4 + $0x80] sm:$0xff]
      %v1718 = vld [vmem:[%s4 + $0x88] sm:$0xff]
      %v1719 = vld [vmem:[%s4 + $0x90] sm:$0xff]
      %v1720 = vld [vmem:[%s4 + $0x98] sm:$0xff]
      %v1721 = vld [vmem:[%s4 + $0xa0] sm:$0xff]
      %v1722 = vld [vmem:[%s4 + $0xa8] sm:$0xff]
      %v1723 = vld [vmem:[%s4 + $0xb0] sm:$0xff]
      %v1724 = vld [vmem:[%s4 + $0xb8] sm:$0xff]
      %v1725 = vld [vmem:[%s4 + $0xc0] sm:$0xff]
      %v1726 = vld [vmem:[%s4 + $0xc8] sm:$0xff]
      %v1727 = vld [vmem:[%s4 + $0xd0] sm:$0xff]
      %v1728 = vld [vmem:[%s4 + $0xd8] sm:$0xff]
      %v1729 = vld [vmem:[%s4 + $0xe0] sm:$0xff]
      %v1730 = vld [vmem:[%s4 + $0xe8] sm:$0xff]
      %v1731 = vld [vmem:[%s4 + $0xf0] sm:$0xff]
      %v1732 = vld [vmem:[%s4 + $0xf8] sm:$0xff]
      %v1733 = vld [vmem:[%s4 + $0x100] sm:$0xff]
      %v1734 = vld [vmem:[%s4 + $0x108] sm:$0xff]
      %v1735 = vld [vmem:[%s4 + $0x110] sm:$0xff]
      %v1736 = vld [vmem:[%s4 + $0x118] sm:$0xff]
      %v1737 = vld [vmem:[%s4 + $0x120] sm:$0xff]
      %v1738 = vld [vmem:[%s4 + $0x128] sm:$0xff]
      %v1739 = vld [vmem:[%s4 + $0x130] sm:$0xff]
      %v1740 = vld [vmem:[%s4 + $0x138] sm:$0xff]
      %v1741 = vld [vmem:[%s4 + $0x140] sm:$0xff]
      %v1742 = vld [vmem:[%s4 + $0x148] sm:$0xff]
      %v1743 = vld [vmem:[%s4 + $0x150] sm:$0xff]
      %v1744 = vld [vmem:[%s4 + $0x158] sm:$0xff]
      %v1745 = vld [vmem:[%s4 + $0x160] sm:$0xff]
      %v1746 = vld [vmem:[%s4 + $0x168] sm:$0xff]
      %v1747 = vld [vmem:[%s4 + $0x170] sm:$0xff]
      %v1748 = vld [vmem:[%s4 + $0x178] sm:$0xff]
      %v1749 = vld [vmem:[%s4 + $0x180] sm:$0xff]
      %v1750 = vld [vmem:[%s4 + $0x188] sm:$0xff]
      %v1751 = vld [vmem:[%s4 + $0x190] sm:$0xff]
      %v1752 = vld [vmem:[%s4 + $0x198] sm:$0xff]
      %v1753 = vld [vmem:[%s4 + $0x1a0] sm:$0xff]
      %v1754 = vld [vmem:[%s4 + $0x1a8] sm:$0xff]
      %v1755 = vld [vmem:[%s4 + $0x1b0] sm:$0xff]
      %v1756 = vld [vmem:[%s4 + $0x1b8] sm:$0xff]
      %v1757 = vld [vmem:[%s4 + $0x1c0] sm:$0xff]
      %v1758 = vld [vmem:[%s4 + $0x1c8] sm:$0xff]
      %v1759 = vld [vmem:[%s4 + $0x1d0] sm:$0xff]
      %v1760 = vld [vmem:[%s4 + $0x1d8] sm:$0xff]
      %v1761 = vld [vmem:[%s9] sm:$0x1]
      %v1763 = vlaneseq
      %v1764 = vshrl.u32 %v1763, 7
      %v1765 = vsub.s32 0, %v1764
      %v1766 = vrot.slane %v1761, %v1765
      %v1769 = vsel %vm1271, %v1699, 0
      %1771 = vmatprep.subr.mxu0 0.0
      %1772 = vmatpush1.msra.mxu0 %v1716
      %1773 = vmatprep.subr.mxu0 0.0
      %1774 = vmatpush1.msra.mxu0 %v1715
      %1775 = vmatprep.subr.mxu0 0.0
      %1776 = vmatpush1.msra.mxu0 %v1714
      %1777 = vmatprep.subr.mxu0 0.0
      %1778 = vmatpush1.msra.mxu0 %v1713
      %1779 = vmatprep.subr.mxu0 0.0
      %1780 = vmatpush1.msra.mxu0 %v1712
      %1781 = vmatprep.subr.mxu0 0.0
      %1782 = vmatpush1.msra.mxu0 %v1711
      %1783 = vmatprep.subr.mxu0 0.0
      %1784 = vmatpush1.msra.mxu0 %v1710
      %1785 = vmatprep.subr.mxu0 0.0
      %1786 = vmatpush1.msra.mxu0 %v1709
      %1787 = vmatprep.subr.mxu0 0.0
      %1788 = vmatpush1.msra.mxu0 %v1708
      %1789 = vmatprep.subr.mxu0 0.0
      %1790 = vmatpush1.msra.mxu0 %v1707
      %1791 = vmatprep.subr.mxu0 0.0
      %1792 = vmatpush1.msra.mxu0 %v1706
      %1793 = vmatprep.subr.mxu0 0.0
      %1794 = vmatpush1.msra.mxu0 %v1705
      %1795 = vmatprep.subr.mxu0 0.0
      %1796 = vmatpush1.msra.mxu0 %v1704
      %1797 = vmatprep.subr.mxu0 0.0
      %1798 = vmatpush1.msra.mxu0 %v1703
      %1799 = vmatprep.subr.mxu0 0.0
      %1800 = vmatpush1.msra.mxu0 %v1702
      %1801 = vmatprep.subr.mxu0 0.0
      %1802 = vmatpush1.msra.mxu0 %v1701
      %1803 = vmatprep.subr.mxu0 0.0
      %1804 = vmatpush2.msra.mxu0 %v1732
      %1805 = vmatprep.subr.mxu0 0.0
      %1806 = vmatpush2.msra.mxu0 %v1731
      %1807 = vmatprep.subr.mxu0 0.0
      %1808 = vmatpush2.msra.mxu0 %v1730
      %1809 = vmatprep.subr.mxu0 0.0
      %1810 = vmatpush2.msra.mxu0 %v1729
      %1811 = vmatprep.subr.mxu0 0.0
      %1812 = vmatpush2.msra.mxu0 %v1728
      %1813 = vmatprep.subr.mxu0 0.0
      %1814 = vmatpush2.msra.mxu0 %v1727
      %1815 = vmatprep.subr.mxu0 0.0
      %1816 = vmatpush2.msra.mxu0 %v1726
      %1817 = vmatprep.subr.mxu0 0.0
      %1818 = vmatpush2.msra.mxu0 %v1725
      %1819 = vmatprep.subr.mxu0 0.0
      %1820 = vmatpush2.msra.mxu0 %v1724
      %1821 = vmatprep.subr.mxu0 0.0
      %1822 = vmatpush2.msra.mxu0 %v1723
      %1823 = vmatprep.subr.mxu0 0.0
      %1824 = vmatpush2.msra.mxu0 %v1722
      %1825 = vmatprep.subr.mxu0 0.0
      %1826 = vmatpush2.msra.mxu0 %v1721
      %1827 = vmatprep.subr.mxu0 0.0
      %1828 = vmatpush2.msra.mxu0 %v1720
      %1829 = vmatprep.subr.mxu0 0.0
      %1830 = vmatpush2.msra.mxu0 %v1719
      %1831 = vmatprep.subr.mxu0 0.0
      %1832 = vmatpush2.msra.mxu0 %v1718
      %1833 = vmatprep.subr.mxu0 0.0
      %1834 = vmatpush2.msra.mxu0 %v1717
      %1835 = vmatprep.mubr.f32.mxu0 %v1628
      %1836 = vmatmul.mubr.f32.gmra.mxu0 %v1626
      %v1837 = vpop.f32.mrf.mxu0
      %v1838 = vadd.f32 %v1766, %v1837
      %v1839 = vpop.f32.mrf.mxu0
      %1840 = vdwg.mxu0
      %1841 = vmatprep.subr.mxu0 0.0
      %1842 = vmatpush1.msra.mxu0 %v1748
      %1843 = vmatprep.subr.mxu0 0.0
      %1844 = vmatpush1.msra.mxu0 %v1747
      %1845 = vmatprep.subr.mxu0 0.0
      %1846 = vmatpush1.msra.mxu0 %v1746
      %1847 = vmatprep.subr.mxu0 0.0
      %1848 = vmatpush1.msra.mxu0 %v1745
      %1849 = vmatprep.subr.mxu0 0.0
      %1850 = vmatpush1.msra.mxu0 %v1744
      %1851 = vmatprep.subr.mxu0 0.0
      %1852 = vmatpush1.msra.mxu0 %v1743
      %1853 = vmatprep.subr.mxu0 0.0
      %1854 = vmatpush1.msra.mxu0 %v1742
      %1855 = vmatprep.subr.mxu0 0.0
      %1856 = vmatpush1.msra.mxu0 %v1741
      %1857 = vmatprep.subr.mxu0 0.0
      %1858 = vmatpush1.msra.mxu0 %v1740
      %1859 = vmatprep.subr.mxu0 0.0
      %1860 = vmatpush1.msra.mxu0 %v1739
      %1861 = vmatprep.subr.mxu0 0.0
      %1862 = vmatpush1.msra.mxu0 %v1738
      %1863 = vmatprep.subr.mxu0 0.0
      %1864 = vmatpush1.msra.mxu0 %v1737
      %1865 = vmatprep.subr.mxu0 0.0
      %1866 = vmatpush1.msra.mxu0 %v1736
      %1867 = vmatprep.subr.mxu0 0.0
      %1868 = vmatpush1.msra.mxu0 %v1735
      %1869 = vmatprep.subr.mxu0 0.0
      %1870 = vmatpush1.msra.mxu0 %v1734
      %1871 = vmatprep.subr.mxu0 0.0
      %1872 = vmatpush1.msra.mxu0 %v1733
      %1873 = vmatprep.subr.mxu0 0.0
      %1874 = vmatpush2.msra.mxu0 0.0
      %1875 = vmatprep.subr.mxu0 0.0
      %1876 = vmatpush2.msra.mxu0 0.0
      %1877 = vmatprep.subr.mxu0 0.0
      %1878 = vmatpush2.msra.mxu0 0.0
      %1879 = vmatprep.subr.mxu0 0.0
      %1880 = vmatpush2.msra.mxu0 0.0
      %1881 = vmatprep.subr.mxu0 0.0
      %1882 = vmatpush2.msra.mxu0 %v1760
      %1883 = vmatprep.subr.mxu0 0.0
      %1884 = vmatpush2.msra.mxu0 %v1759
      %1885 = vmatprep.subr.mxu0 0.0
      %1886 = vmatpush2.msra.mxu0 %v1758
      %1887 = vmatprep.subr.mxu0 0.0
      %1888 = vmatpush2.msra.mxu0 %v1757
      %1889 = vmatprep.subr.mxu0 0.0
      %1890 = vmatpush2.msra.mxu0 %v1756
      %1891 = vmatprep.subr.mxu0 0.0
      %1892 = vmatpush2.msra.mxu0 %v1755
      %1893 = vmatprep.subr.mxu0 0.0
      %1894 = vmatpush2.msra.mxu0 %v1754
      %1895 = vmatprep.subr.mxu0 0.0
      %1896 = vmatpush2.msra.mxu0 %v1753
      %1897 = vmatprep.subr.mxu0 0.0
      %1898 = vmatpush2.msra.mxu0 %v1752
      %1899 = vmatprep.subr.mxu0 0.0
      %1900 = vmatpush2.msra.mxu0 %v1751
      %1901 = vmatprep.subr.mxu0 0.0
      %1902 = vmatpush2.msra.mxu0 %v1750
      %1903 = vmatprep.subr.mxu0 0.0
      %1904 = vmatpush2.msra.mxu0 %v1749
      %1905 = vmatprep.mubr.f32.mxu0 %v1769
      %1906 = vmatmul.mubr.f32.gmra.mxu0 %v1697
      %v1907 = vpop.f32.mrf.mxu0
      %v1908 = vadd.f32 %v1838, %v1907
      %v1909 = vpop.f32.mrf.mxu0
      %1910 = vdwg.mxu0
      %vm1911 = vcmp.ge.f32.partialorder %v1908, 0.0
      %v1912 = vmul.f32 %v1908, 0.2
      %v1913 = vsel %vm1911, %v1908, %v1912
      %v1915 = vrot.slane %v1913, 1
      %1916 = vrot.lane.b32.xlu0 %v1915, 64
      %v1917 = vpop.permute.xlu0 %1916
      %v1919 = vrot.slane %v1913, 2
      %v1921 = vrot.slane %v1913, 3
      %1922 = vrot.lane.b32.xlu0 %v1921, 64
      %v1923 = vpop.permute.xlu0 %1922
      %v1925 = vsel %vm1274, %v1913, %v1917
      %v1926 = vsel %vm1274, %v1919, %v1923
      %v1927 = vld [vmem:[%s5] sm:$0xff]
      %v1928 = vld [vmem:[%s5 + $0x8] sm:$0xff]
      %v1929 = vld [vmem:[%s5 + $0x10] sm:$0xff]
      %v1930 = vld [vmem:[%s5 + $0x18] sm:$0xff]
      %v1931 = vld [vmem:[%s5 + $0x20] sm:$0xff]
      %v1932 = vld [vmem:[%s5 + $0x28] sm:$0xff]
      %v1933 = vld [vmem:[%s5 + $0x30] sm:$0xff]
      %v1934 = vld [vmem:[%s5 + $0x38] sm:$0xff]
      %v1935 = vld [vmem:[%s5 + $0x40] sm:$0xff]
      %v1936 = vld [vmem:[%s5 + $0x48] sm:$0xff]
      %v1937 = vld [vmem:[%s5 + $0x50] sm:$0xff]
      %v1938 = vld [vmem:[%s5 + $0x58] sm:$0xff]
      %v1939 = vld [vmem:[%s5 + $0x60] sm:$0xff]
      %v1940 = vld [vmem:[%s5 + $0x68] sm:$0xff]
      %v1941 = vld [vmem:[%s5 + $0x70] sm:$0xff]
      %v1942 = vld [vmem:[%s5 + $0x78] sm:$0xff]
      %v1943 = vld [vmem:[%s5 + $0x80] sm:$0xff]
      %v1944 = vld [vmem:[%s5 + $0x88] sm:$0xff]
      %v1945 = vld [vmem:[%s5 + $0x90] sm:$0xff]
      %v1946 = vld [vmem:[%s5 + $0x98] sm:$0xff]
      %v1947 = vld [vmem:[%s5 + $0xa0] sm:$0xff]
      %v1948 = vld [vmem:[%s5 + $0xa8] sm:$0xff]
      %v1949 = vld [vmem:[%s5 + $0xb0] sm:$0xff]
      %v1950 = vld [vmem:[%s5 + $0xb8] sm:$0xff]
      %v1951 = vld [vmem:[%s5 + $0xc0] sm:$0xff]
      %v1952 = vld [vmem:[%s5 + $0xc8] sm:$0xff]
      %v1953 = vld [vmem:[%s5 + $0xd0] sm:$0xff]
      %v1954 = vld [vmem:[%s5 + $0xd8] sm:$0xff]
      %v1955 = vld [vmem:[%s5 + $0xe0] sm:$0xff]
      %v1956 = vld [vmem:[%s5 + $0xe8] sm:$0xff]
      %v1957 = vld [vmem:[%s5 + $0xf0] sm:$0xff]
      %v1958 = vld [vmem:[%s5 + $0xf8] sm:$0xff]
      %v1959 = vld [vmem:[#allocation2] sm:$0x1]
      %1960 = vmatprep.subr.mxu0 0.0
      %1961 = vmatpush1.msra.mxu0 %v1942
      %1962 = vmatprep.subr.mxu0 0.0
      %1963 = vmatpush1.msra.mxu0 %v1941
      %1964 = vmatprep.subr.mxu0 0.0
      %1965 = vmatpush1.msra.mxu0 %v1940
      %1966 = vmatprep.subr.mxu0 0.0
      %1967 = vmatpush1.msra.mxu0 %v1939
      %1968 = vmatprep.subr.mxu0 0.0
      %1969 = vmatpush1.msra.mxu0 %v1938
      %1970 = vmatprep.subr.mxu0 0.0
      %1971 = vmatpush1.msra.mxu0 %v1937
      %1972 = vmatprep.subr.mxu0 0.0
      %1973 = vmatpush1.msra.mxu0 %v1936
      %1974 = vmatprep.subr.mxu0 0.0
      %1975 = vmatpush1.msra.mxu0 %v1935
      %1976 = vmatprep.subr.mxu0 0.0
      %1977 = vmatpush1.msra.mxu0 %v1934
      %1978 = vmatprep.subr.mxu0 0.0
      %1979 = vmatpush1.msra.mxu0 %v1933
      %1980 = vmatprep.subr.mxu0 0.0
      %1981 = vmatpush1.msra.mxu0 %v1932
      %1982 = vmatprep.subr.mxu0 0.0
      %1983 = vmatpush1.msra.mxu0 %v1931
      %1984 = vmatprep.subr.mxu0 0.0
      %1985 = vmatpush1.msra.mxu0 %v1930
      %1986 = vmatprep.subr.mxu0 0.0
      %1987 = vmatpush1.msra.mxu0 %v1929
      %1988 = vmatprep.subr.mxu0 0.0
      %1989 = vmatpush1.msra.mxu0 %v1928
      %1990 = vmatprep.subr.mxu0 0.0
      %1991 = vmatpush1.msra.mxu0 %v1927
      %1992 = vmatprep.subr.mxu0 0.0
      %1993 = vmatpush2.msra.mxu0 %v1958
      %1994 = vmatprep.subr.mxu0 0.0
      %1995 = vmatpush2.msra.mxu0 %v1957
      %1996 = vmatprep.subr.mxu0 0.0
      %1997 = vmatpush2.msra.mxu0 %v1956
      %1998 = vmatprep.subr.mxu0 0.0
      %1999 = vmatpush2.msra.mxu0 %v1955
      %2000 = vmatprep.subr.mxu0 0.0
      %2001 = vmatpush2.msra.mxu0 %v1954
      %2002 = vmatprep.subr.mxu0 0.0
      %2003 = vmatpush2.msra.mxu0 %v1953
      %2004 = vmatprep.subr.mxu0 0.0
      %2005 = vmatpush2.msra.mxu0 %v1952
      %2006 = vmatprep.subr.mxu0 0.0
      %2007 = vmatpush2.msra.mxu0 %v1951
      %2008 = vmatprep.subr.mxu0 0.0
      %2009 = vmatpush2.msra.mxu0 %v1950
      %2010 = vmatprep.subr.mxu0 0.0
      %2011 = vmatpush2.msra.mxu0 %v1949
      %2012 = vmatprep.subr.mxu0 0.0
      %2013 = vmatpush2.msra.mxu0 %v1948
      %2014 = vmatprep.subr.mxu0 0.0
      %2015 = vmatpush2.msra.mxu0 %v1947
      %2016 = vmatprep.subr.mxu0 0.0
      %2017 = vmatpush2.msra.mxu0 %v1946
      %2018 = vmatprep.subr.mxu0 0.0
      %2019 = vmatpush2.msra.mxu0 %v1945
      %2020 = vmatprep.subr.mxu0 0.0
      %2021 = vmatpush2.msra.mxu0 %v1944
      %2022 = vmatprep.subr.mxu0 0.0
      %2023 = vmatpush2.msra.mxu0 %v1943
      %2024 = vmatprep.mubr.f32.mxu0 %v1926
      %2025 = vmatmul.mubr.f32.gmra.mxu0 %v1925
      %v2026 = vpop.f32.mrf.mxu0
      %v2027 = vadd.f32 %v1959, %v2026
      %v2028 = vpop.f32.mrf.mxu0
      %2029 = vdwg.mxu0
      %v2030 = vsub.f32 0.0, %v2027
      %v2031 = vmul.f32 %v2030, 1.442695
      %v2032 = vpow.pop %v2031
      %v2033 = vadd.f32 %v2032, 1.0
      %v2034 = vrcp.pop %v2033
      %v2035 = vmul.f32 1.0, %v2034
      %vm2036 = vcmask 0
      %2037 = vst.msk [vmem:[%s384] sm:$0x1] %vm2036, %v2035
      %p2038 = scmp.lt.s32.totalorder %s24, 1
      %s2039 = scalar_select %p2038, %s24, 1
      %s2040 = scalar_lea.vmem %s11, %s2039
      // Predicated region
      $region65: #{tpu_custom_call.1} parent=63 // pred_check
        %p2041 = pneg %p278
      $region66: #{tpu_custom_call.1} parent=63 // pred_check_branch
        %2043 = sbr.rel (%p2041) target = $region68
      $region67: #{tpu_custom_call.1} parent=63 // pred_region
        _
      $region68: #{tpu_custom_call.1} parent=63 // pred_fallthru
        _
    $region64: #{tpu_custom_call.1} parent=5 // pred_fallthru
      _
    %p2044 = scmp.le.s32.totalorder 2, %s19
    // Predicated region
    $region69: #{tpu_custom_call.1} parent=5 // pred_check
      %p2045 = pneg %p2044
    $region70: #{tpu_custom_call.1} parent=5 // pred_check_branch
      %2047 = sbr.rel (%p2045) target = $region72
    $region71: #{tpu_custom_call.1} parent=5 // pred_region
      %s2048 = ssub.s32 %s19, 2
      // Predicated region
      $region73: #{tpu_custom_call.1} parent=71 // pred_check
        %p2049 = pneg %p284
      $region74: #{tpu_custom_call.1} parent=71 // pred_check_branch
        %2051 = sbr.rel (%p2049) target = $region76
      $region75: #{tpu_custom_call.1} parent=71 // pred_region
        %p2052 = scmp.lt.s32.totalorder %s25, 1
        %s2053 = scalar_select %p2052, %s25, 1
        %s2054 = scalar_lea.vmem %s11, %s2053
      $region76: #{tpu_custom_call.1} parent=71 // pred_fallthru
        _
    $region72: #{tpu_custom_call.1} parent=5 // pred_fallthru
      _
  $region6: #{tpu_custom_call.1} parent=0 // loop_footer
    %s23 = sadd.s32 1, %s19
  $region7: #{tpu_custom_call.1} parent=0 // loop_footer_branch
    %18 = sbr.rel target = $region3
  $region8: #{tpu_custom_call.1} parent=0 // loop_exit
    _

</llo_original>
